<compile_context>
chip_gen: v7x
topology: tpu7x:2x2x1
jax: 0.10.0
libtpu: 0.0.40
codegen_flags: <defaults>
</compile_context>

<pallas_src>
import functools

import jax
import jax.numpy as jnp
from jax.experimental import pallas as pl
from jax.experimental.pallas import tpu as pltpu

LEAKY_SLOPE = 0.2
BN_EPS = 1e-5


def _leaky(x):
    return jnp.where(x >= 0.0, x, LEAKY_SLOPE * x)


def _sigmoid(x):
    return 0.5 * (jnp.tanh(0.5 * x) + 1.0)


# --------------------------------------------------------------------------- #
# Pallas kernels
# --------------------------------------------------------------------------- #
def _conv_leaky_kernel(x_ref, w_ref, b_ref, o_ref):
    """One MXU matmul + (folded) bias + LeakyReLU, bf16 store."""
    acc = jnp.dot(x_ref[...], w_ref[...], preferred_element_type=jnp.float32)
    acc = _leaky(acc + b_ref[...])
    o_ref[...] = acc.astype(o_ref.dtype)


def _core_dilate_kernel(x_ref, w1_ref, b1_ref, w2_ref, b2_ref, o_ref):
    """Core block (both branches concatenated in w1, BN folded) + LeakyReLU,
    then the 1x1 dilate conv (BN folded) + LeakyReLU.  Two chained matmuls;
    the intermediate never leaves VMEM."""
    h = jnp.dot(x_ref[...], w1_ref[...], preferred_element_type=jnp.float32)
    h = _leaky(h + b1_ref[...])
    y = jnp.dot(h.astype(w2_ref.dtype), w2_ref[...],
                preferred_element_type=jnp.float32)
    y = _leaky(y + b2_ref[...])
    o_ref[...] = y.astype(o_ref.dtype)


def _core_conv1_sigmoid_kernel(x_ref, w1_ref, b1_ref, w2_ref, o_ref, *,
                               batch, hh, ww):
    """block3 Core (matmul + folded BN + LeakyReLU), then an in-VMEM 2x2/s1
    im2col over the (batch, hh, ww, C) rows of h (all indices static), then
    the final 1x1-equivalent reduction for conv1 and sigmoid."""
    h = jnp.dot(x_ref[...], w1_ref[...], preferred_element_type=jnp.float32)
    h = _leaky(h + b1_ref[...])                    # (batch*hh*ww, C) f32

    def row(b, i, j):                              # one spatial position, (1, C)
        r = b * (hh * ww) + i * ww + j
        return h[r:r + 1, :]

    out_rows = []
    for b in range(batch):
        for oi in range(hh - 1):
            for oj in range(ww - 1):
                out_rows.append(jnp.concatenate(
                    [row(b, oi, oj), row(b, oi, oj + 1),
                     row(b, oi + 1, oj), row(b, oi + 1, oj + 1)], axis=1))
    patches = jnp.concatenate(out_rows, axis=0)    # (batch*(hh-1)*(ww-1), 4*C)

    # conv1 has a single output channel -> lane-reduction instead of an N=1 matmul
    y = jnp.sum(patches * w2_ref[...], axis=1, keepdims=True)
    o_ref[...] = _sigmoid(y).astype(o_ref.dtype)


# --------------------------------------------------------------------------- #
# pallas_call wrappers (full-extent blocks, no padding, no output slicing)
# --------------------------------------------------------------------------- #
def conv_leaky(x, w, b, out_dtype=jnp.bfloat16):
    M, K = x.shape
    Kw, N = w.shape
    assert Kw == K
    if M >= 256 and (M % 2 == 0) and ((M // 2) % 8 == 0):
        tm, gm = M // 2, 2          # one M-tile per TensorCore on v7x
    else:
        tm, gm = M, 1
    return pl.pallas_call(
        _conv_leaky_kernel,
        out_shape=jax.ShapeDtypeStruct((M, N), out_dtype),
        grid=(gm,),
        in_specs=[
            pl.BlockSpec((tm, K), lambda i: (i, 0)),   # patch rows (tiled M)
            pl.BlockSpec((K, N), lambda i: (0, 0)),    # weights (resident)
            pl.BlockSpec((1, N), lambda i: (0, 0)),    # bias
        ],
        out_specs=pl.BlockSpec((tm, N), lambda i: (i, 0)),
        compiler_params=pltpu.CompilerParams(dimension_semantics=("parallel",)),
    )(x, w, b)


def core_dilate(x, w1, b1, w2, b2, out_dtype=jnp.bfloat16):
    M, K = x.shape
    _, N1 = w1.shape
    _, N2 = w2.shape
    return pl.pallas_call(
        _core_dilate_kernel,
        out_shape=jax.ShapeDtypeStruct((M, N2), out_dtype),
        grid=(1,),
        in_specs=[
            pl.BlockSpec((M, K), lambda i: (0, 0)),
            pl.BlockSpec((K, N1), lambda i: (0, 0)),
            pl.BlockSpec((1, N1), lambda i: (0, 0)),
            pl.BlockSpec((N1, N2), lambda i: (0, 0)),
            pl.BlockSpec((1, N2), lambda i: (0, 0)),
        ],
        out_specs=pl.BlockSpec((M, N2), lambda i: (0, 0)),
        compiler_params=pltpu.CompilerParams(dimension_semantics=("arbitrary",)),
    )(x, w1, b1, w2, b2)


def core_conv1_sigmoid(x, w1, b1, w2, batch, hh, ww):
    M, K = x.shape
    _, N1 = w1.shape
    _, K2 = w2.shape                 # w2 is (1, 4*N1) pre-transposed f32
    assert M == batch * hh * ww and K2 == 4 * N1
    Mo = batch * (hh - 1) * (ww - 1)
    kern = functools.partial(_core_conv1_sigmoid_kernel,
                             batch=batch, hh=hh, ww=ww)
    return pl.pallas_call(
        kern,
        out_shape=jax.ShapeDtypeStruct((Mo, 1), jnp.float32),
        grid=(1,),
        in_specs=[
            pl.BlockSpec((M, K), lambda i: (0, 0)),
            pl.BlockSpec((K, N1), lambda i: (0, 0)),
            pl.BlockSpec((1, N1), lambda i: (0, 0)),
            pl.BlockSpec((1, K2), lambda i: (0, 0)),
        ],
        out_specs=pl.BlockSpec((Mo, 1), lambda i: (0, 0)),
        compiler_params=pltpu.CompilerParams(dimension_semantics=("arbitrary",)),
    )(x, w1, b1, w2)


# --------------------------------------------------------------------------- #
# Plain-JAX glue: im2col patch extraction (stays outside the kernels)
# --------------------------------------------------------------------------- #
def im2col(x, kh, kw, stride, pad):
    """x: (B, H, W, C) -> patches (B*Ho*Wo, kh*kw*C); dtype preserved (bf16)."""
    if pad:
        x = jnp.pad(x, ((0, 0), (pad, pad), (pad, pad), (0, 0)))
    B, Hp, Wp, C = x.shape
    Ho = (Hp - kh) // stride + 1
    Wo = (Wp - kw) // stride + 1
    cols = []
    for i in range(kh):
        for j in range(kw):
            cols.append(x[:, i:i + stride * Ho:stride, j:j + stride * Wo:stride, :])
    patches = jnp.stack(cols, axis=3)            # (B, Ho, Wo, kh*kw, C)
    return patches.reshape(B * Ho * Wo, kh * kw * C), B, Ho, Wo


# --------------------------------------------------------------------------- #
# One-time parameter prep: transpose/reshape, BN folding, bf16 cast
# --------------------------------------------------------------------------- #
def _bn_affine(bn):
    gamma, beta, mean, var = bn
    scale = gamma / jnp.sqrt(var + BN_EPS)
    shift = beta - mean * scale
    return scale, shift


def _w_to_mat(w_oihw):
    # match im2col column ordering: (kh, kw, C_in) major->minor
    O, I, kh, kw = w_oihw.shape
    return jnp.transpose(w_oihw, (2, 3, 1, 0)).reshape(kh * kw * I, O)


def _fold(w_mat, scale, shift):
    """Fold BN scale into weights (then cast bf16); shift stays f32 bias."""
    w = (w_mat * scale[None, :]).astype(jnp.bfloat16)
    b = shift.reshape(1, -1).astype(jnp.float32)
    return w, b


def prepare_params(p):
    """Done once, outside the per-forward path.  Returns an array-only pytree
    (safe to pass through jax.jit — no Python ints / static metadata)."""
    def plain(w_oihw):
        w = _w_to_mat(w_oihw)
        n = w.shape[1]
        return _fold(w, jnp.ones((n,), jnp.float32), jnp.zeros((n,), jnp.float32))

    def core(blk):
        w = jnp.concatenate([_w_to_mat(blk["conv_a"]), _w_to_mat(blk["conv_b"])],
                            axis=1)
        return _fold(w, *_bn_affine(blk["bn"]))

    def dilate(dl):
        return _fold(_w_to_mat(dl["conv"]), *_bn_affine(dl["bn"]))

    prep = {}
    prep["conv0"] = plain(p["conv0"])                       # (w, b)
    prep["stage1"] = core(p["block1"]) + dilate(p["dilate1"])   # (w1,b1,w2,b2)
    prep["stage2"] = core(p["block2"]) + dilate(p["dilate2"])   # (w1,b1,w2,b2)
    w3, b3 = core(p["block3"])
    w_c1 = _w_to_mat(p["conv1"]).reshape(1, -1).astype(jnp.float32)  # (1, 4*16D)
    prep["stage3"] = (w3, b3, w_c1)
    return prep


# --------------------------------------------------------------------------- #
# Parameters (deterministic synthetic init; shapes follow the module __init__)
# --------------------------------------------------------------------------- #
def init_params(key, num_classes=3, image_dim=8):
    D = image_dim
    keys = iter(jax.random.split(key, 40))

    def conv_w(o, i, kh, kw):
        return 0.05 * jax.random.normal(next(keys), (o, i, kh, kw), jnp.float32)

    def bn_p(c):
        gamma = 1.0 + 0.1 * jax.random.normal(next(keys), (c,), jnp.float32)
        beta = 0.1 * jax.random.normal(next(keys), (c,), jnp.float32)
        mean = 0.1 * jax.random.normal(next(keys), (c,), jnp.float32)
        var = 0.5 + jnp.abs(jax.random.normal(next(keys), (c,), jnp.float32))
        return (gamma, beta, mean, var)

    return {
        "conv0": conv_w(D, num_classes, 3, 3),
        "block1": {"conv_a": conv_w(2 * D, D, 3, 3),
                   "conv_b": conv_w(2 * D, D, 3, 3), "bn": bn_p(4 * D)},
        "dilate1": {"conv": conv_w(2 * D, 4 * D, 1, 1), "bn": bn_p(2 * D)},
        "block2": {"conv_a": conv_w(4 * D, 2 * D, 3, 3),
                   "conv_b": conv_w(4 * D, 2 * D, 3, 3), "bn": bn_p(8 * D)},
        "dilate2": {"conv": conv_w(4 * D, 8 * D, 1, 1), "bn": bn_p(4 * D)},
        "block3": {"conv_a": conv_w(8 * D, 4 * D, 2, 2),
                   "conv_b": conv_w(8 * D, 4 * D, 2, 2), "bn": bn_p(16 * D)},
        "conv1": conv_w(1, 16 * D, 2, 2),
    }


# --------------------------------------------------------------------------- #
# Forward pass (mirrors Discriminator.forward) — 4 pallas_calls total
# --------------------------------------------------------------------------- #
def discriminator_forward(prep, x_nchw):
    # NCHW -> NHWC and single bf16 cast at model entry
    x = jnp.transpose(x_nchw, (0, 2, 3, 1)).astype(jnp.bfloat16)

    # conv0 (3x3, s1, p1) + LeakyReLU
    w, b = prep["conv0"]
    patches, B, Ho, Wo = im2col(x, 3, 3, 1, 1)
    x = conv_leaky(patches, w, b).reshape(B, Ho, Wo, -1)

    # block1 (Core 3x3 s2 p1) + dilate1 (1x1) -- one fused kernel
    w1, b1, w2, b2 = prep["stage1"]
    patches, B, Ho, Wo = im2col(x, 3, 3, 2, 1)
    x = core_dilate(patches, w1, b1, w2, b2).reshape(B, Ho, Wo, -1)

    # block2 (Core 3x3 s2 p1) + dilate2 (1x1) -- one fused kernel
    w1, b1, w2, b2 = prep["stage2"]
    patches, B, Ho, Wo = im2col(x, 3, 3, 2, 1)
    x = core_dilate(patches, w1, b1, w2, b2).reshape(B, Ho, Wo, -1)

    # block3 (Core 2x2 s2 p1) + conv1 (2x2 s1 p0) + sigmoid -- one fused kernel
    w1, b1, w2 = prep["stage3"]
    patches, B, Ho, Wo = im2col(x, 2, 2, 2, 1)
    y = core_conv1_sigmoid(patches, w1, b1, w2, B, Ho, Wo)
    y = y.reshape(B, Ho - 1, Wo - 1, 1)
    return jnp.transpose(y, (0, 3, 1, 2))                  # NHWC -> NCHW


if __name__ == "__main__":
    key = jax.random.PRNGKey(0)
    kp, kx = jax.random.split(key)

    num_classes, image_dim = 3, 8          # small synthetic config
    B, H, W = 2, 16, 16                    # input spatial 16x16

    raw_params = init_params(kp, num_classes, image_dim)
    prep = prepare_params(raw_params)      # one-time weight prep
    x = jax.random.normal(kx, (B, num_classes, H, W), jnp.float32)

    fwd = jax.jit(discriminator_forward)
    out = jax.block_until_ready(fwd(prep, x))

    # 16 -> 16 (conv0) -> 8 (block1) -> 4 (block2) -> 3 (block3, k2 s2 p1) -> 2 (conv1)
    assert out.shape == (B, 1, 2, 2), out.shape
    assert bool(jnp.all(jnp.isfinite(out)))
    assert bool(jnp.all((out >= 0.0) & (out <= 1.0)))
    print("KERNEL_OK")
</pallas_src>

<mosaic_0001>
module attributes {stable_mosaic.version = 11 : i64} {
  func.func @_conv_leaky_kernel(%arg0: i32, %arg1: memref<256x27xbf16, #tpu.memory_space<vmem>>, %arg2: memref<27x8xbf16, #tpu.memory_space<vmem>>, %arg3: memref<1x8xf32, #tpu.memory_space<vmem>>, %arg4: memref<256x8xbf16, #tpu.memory_space<vmem>>) attributes {dimension_semantics = [#tpu.dimension_semantics<parallel>], iteration_bounds = array<i64: 2>, scalar_prefetch = 0 : i64, scratch_operands = 0 : i64, tpu.core_type = #tpu.core_type<tc>, window_params = [{transform_indices = @transform_0, window_bounds = array<i64: 256, 27>}, {pipeline_mode = #tpu.pipeline_mode<synchronous>, transform_indices = @transform_1, window_bounds = array<i64: 27, 8>}, {pipeline_mode = #tpu.pipeline_mode<synchronous>, transform_indices = @transform_2, window_bounds = array<i64: 1, 8>}, {transform_indices = @transform_3, window_bounds = array<i64: 256, 8>}]} {
    %c0 = arith.constant 0 : index
    %c0_0 = arith.constant 0 : index
    %0 = vector.load %arg1[%c0, %c0_0] : memref<256x27xbf16, #tpu.memory_space<vmem>>, vector<256x27xbf16>
    %c0_1 = arith.constant 0 : index
    %c0_2 = arith.constant 0 : index
    %1 = vector.load %arg2[%c0_1, %c0_2] : memref<27x8xbf16, #tpu.memory_space<vmem>>, vector<27x8xbf16>
    %cst = arith.constant dense<0.000000e+00> : vector<256x8xf32>
    %2 = tpu.matmul %0, %1, %cst {dimension_numbers = #tpu.dot_dimension_numbers<[1], [0], [0], [1], [0, 0, 1, 1], [], []>} : vector<256x27xbf16>, vector<27x8xbf16>, vector<256x8xf32> -> vector<256x8xf32>
    %c0_3 = arith.constant 0 : index
    %c0_4 = arith.constant 0 : index
    %3 = vector.load %arg3[%c0_3, %c0_4] : memref<1x8xf32, #tpu.memory_space<vmem>>, vector<1x8xf32>
    %4 = vector.broadcast %3 : vector<1x8xf32> to vector<256x8xf32>
    %5 = arith.addf %2, %4 : vector<256x8xf32>
    %cst_5 = arith.constant 0.000000e+00 : f32
    %6 = vector.broadcast %cst_5 : f32 to vector<256x8xf32>
    %7 = arith.cmpf oge, %5, %6 : vector<256x8xf32>
    %cst_6 = arith.constant 2.000000e-01 : f32
    %8 = vector.broadcast %cst_6 : f32 to vector<256x8xf32>
    %9 = arith.mulf %8, %5 : vector<256x8xf32>
    %10 = arith.select %7, %5, %9 : vector<256x8xi1>, vector<256x8xf32>
    %11 = arith.truncf %10 : vector<256x8xf32> to vector<256x8xbf16>
    %c0_7 = arith.constant 0 : index
    %c0_8 = arith.constant 0 : index
    %12 = vector.load %arg4[%c0_7, %c0_8] : memref<256x8xbf16, #tpu.memory_space<vmem>>, vector<256x8xbf16>
    tpu.vector_store %arg4[%c0_7, %c0_8], %11 {strides = array<i32>} : memref<256x8xbf16, #tpu.memory_space<vmem>>, vector<256x8xbf16>,
    return
  }
  func.func @transform_0(%arg0: i32) -> (i32, i32) {
    %c0_i32 = arith.constant 0 : i32
    %c0_i32_0 = arith.constant 0 : i32
    return %arg0, %c0_i32 : i32, i32
  }
  func.func @transform_1(%arg0: i32) -> (i32, i32) {
    %c0_i32 = arith.constant 0 : i32
    %c0_i32_0 = arith.constant 0 : i32
    %c0_i32_1 = arith.constant 0 : i32
    return %c0_i32, %c0_i32_0 : i32, i32
  }
  func.func @transform_2(%arg0: i32) -> (i32, i32) {
    %c0_i32 = arith.constant 0 : i32
    %c0_i32_0 = arith.constant 0 : i32
    %c0_i32_1 = arith.constant 0 : i32
    return %c0_i32, %c0_i32_0 : i32, i32
  }
  func.func @transform_3(%arg0: i32) -> (i32, i32) {
    %c0_i32 = arith.constant 0 : i32
    %c0_i32_0 = arith.constant 0 : i32
    return %arg0, %c0_i32 : i32, i32
  }
}

module attributes {stable_mosaic.version = 11 : i64} {
  func.func @_core_dilate_kernel(%arg0: i32, %arg1: memref<128x72xbf16, #tpu.memory_space<vmem>>, %arg2: memref<72x32xbf16, #tpu.memory_space<vmem>>, %arg3: memref<1x32xf32, #tpu.memory_space<vmem>>, %arg4: memref<32x16xbf16, #tpu.memory_space<vmem>>, %arg5: memref<1x16xf32, #tpu.memory_space<vmem>>, %arg6: memref<128x16xbf16, #tpu.memory_space<vmem>>) attributes {dimension_semantics = [#tpu.dimension_semantics<arbitrary>], iteration_bounds = array<i64: 1>, scalar_prefetch = 0 : i64, scratch_operands = 0 : i64, tpu.core_type = #tpu.core_type<tc>, window_params = [{pipeline_mode = #tpu.pipeline_mode<synchronous>, transform_indices = @transform_0, window_bounds = array<i64: 128, 72>}, {pipeline_mode = #tpu.pipeline_mode<synchronous>, transform_indices = @transform_1, window_bounds = array<i64: 72, 32>}, {pipeline_mode = #tpu.pipeline_mode<synchronous>, transform_indices = @transform_2, window_bounds = array<i64: 1, 32>}, {pipeline_mode = #tpu.pipeline_mode<synchronous>, transform_indices = @transform_3, window_bounds = array<i64: 32, 16>}, {pipeline_mode = #tpu.pipeline_mode<synchronous>, transform_indices = @transform_4, window_bounds = array<i64: 1, 16>}, {pipeline_mode = #tpu.pipeline_mode<synchronous>, transform_indices = @transform_5, window_bounds = array<i64: 128, 16>}]} {
    %c0 = arith.constant 0 : index
    %c0_0 = arith.constant 0 : index
    %0 = vector.load %arg1[%c0, %c0_0] : memref<128x72xbf16, #tpu.memory_space<vmem>>, vector<128x72xbf16>
    %c0_1 = arith.constant 0 : index
    %c0_2 = arith.constant 0 : index
    %1 = vector.load %arg2[%c0_1, %c0_2] : memref<72x32xbf16, #tpu.memory_space<vmem>>, vector<72x32xbf16>
    %cst = arith.constant dense<0.000000e+00> : vector<128x32xf32>
    %2 = tpu.matmul %0, %1, %cst {dimension_numbers = #tpu.dot_dimension_numbers<[1], [0], [0], [1], [0, 0, 1, 1], [], []>} : vector<128x72xbf16>, vector<72x32xbf16>, vector<128x32xf32> -> vector<128x32xf32>
    %c0_3 = arith.constant 0 : index
    %c0_4 = arith.constant 0 : index
    %3 = vector.load %arg3[%c0_3, %c0_4] : memref<1x32xf32, #tpu.memory_space<vmem>>, vector<1x32xf32>
    %4 = vector.broadcast %3 : vector<1x32xf32> to vector<128x32xf32>
    %5 = arith.addf %2, %4 : vector<128x32xf32>
    %cst_5 = arith.constant 0.000000e+00 : f32
    %6 = vector.broadcast %cst_5 : f32 to vector<128x32xf32>
    %7 = arith.cmpf oge, %5, %6 : vector<128x32xf32>
    %cst_6 = arith.constant 2.000000e-01 : f32
    %8 = vector.broadcast %cst_6 : f32 to vector<128x32xf32>
    %9 = arith.mulf %8, %5 : vector<128x32xf32>
    %10 = arith.select %7, %5, %9 : vector<128x32xi1>, vector<128x32xf32>
    %11 = arith.truncf %10 : vector<128x32xf32> to vector<128x32xbf16>
    %c0_7 = arith.constant 0 : index
    %c0_8 = arith.constant 0 : index
    %12 = vector.load %arg4[%c0_7, %c0_8] : memref<32x16xbf16, #tpu.memory_space<vmem>>, vector<32x16xbf16>
    %cst_9 = arith.constant dense<0.000000e+00> : vector<128x16xf32>
    %13 = tpu.matmul %11, %12, %cst_9 {dimension_numbers = #tpu.dot_dimension_numbers<[1], [0], [0], [1], [0, 0, 1, 1], [], []>} : vector<128x32xbf16>, vector<32x16xbf16>, vector<128x16xf32> -> vector<128x16xf32>
    %c0_10 = arith.constant 0 : index
    %c0_11 = arith.constant 0 : index
    %14 = vector.load %arg5[%c0_10, %c0_11] : memref<1x16xf32, #tpu.memory_space<vmem>>, vector<1x16xf32>
    %15 = vector.broadcast %14 : vector<1x16xf32> to vector<128x16xf32>
    %16 = arith.addf %13, %15 : vector<128x16xf32>
    %cst_12 = arith.constant 0.000000e+00 : f32
    %17 = vector.broadcast %cst_12 : f32 to vector<128x16xf32>
    %18 = arith.cmpf oge, %16, %17 : vector<128x16xf32>
    %cst_13 = arith.constant 2.000000e-01 : f32
    %19 = vector.broadcast %cst_13 : f32 to vector<128x16xf32>
    %20 = arith.mulf %19, %16 : vector<128x16xf32>
    %21 = arith.select %18, %16, %20 : vector<128x16xi1>, vector<128x16xf32>
    %22 = arith.truncf %21 : vector<128x16xf32> to vector<128x16xbf16>
    %c0_14 = arith.constant 0 : index
    %c0_15 = arith.constant 0 : index
    %23 = vector.load %arg6[%c0_14, %c0_15] : memref<128x16xbf16, #tpu.memory_space<vmem>>, vector<128x16xbf16>
    tpu.vector_store %arg6[%c0_14, %c0_15], %22 {strides = array<i32>} : memref<128x16xbf16, #tpu.memory_space<vmem>>, vector<128x16xbf16>,
    return
  }
  func.func @transform_0(%arg0: i32) -> (i32, i32) {
    %c0_i32 = arith.constant 0 : i32
    %c0_i32_0 = arith.constant 0 : i32
    %c0_i32_1 = arith.constant 0 : i32
    return %c0_i32, %c0_i32_0 : i32, i32
  }
  func.func @transform_1(%arg0: i32) -> (i32, i32) {
    %c0_i32 = arith.constant 0 : i32
    %c0_i32_0 = arith.constant 0 : i32
    %c0_i32_1 = arith.constant 0 : i32
    return %c0_i32, %c0_i32_0 : i32, i32
  }
  func.func @transform_2(%arg0: i32) -> (i32, i32) {
    %c0_i32 = arith.constant 0 : i32
    %c0_i32_0 = arith.constant 0 : i32
    %c0_i32_1 = arith.constant 0 : i32
    return %c0_i32, %c0_i32_0 : i32, i32
  }
  func.func @transform_3(%arg0: i32) -> (i32, i32) {
    %c0_i32 = arith.constant 0 : i32
    %c0_i32_0 = arith.constant 0 : i32
    %c0_i32_1 = arith.constant 0 : i32
    return %c0_i32, %c0_i32_0 : i32, i32
  }
  func.func @transform_4(%arg0: i32) -> (i32, i32) {
    %c0_i32 = arith.constant 0 : i32
    %c0_i32_0 = arith.constant 0 : i32
    %c0_i32_1 = arith.constant 0 : i32
    return %c0_i32, %c0_i32_0 : i32, i32
  }
  func.func @transform_5(%arg0: i32) -> (i32, i32) {
    %c0_i32 = arith.constant 0 : i32
    %c0_i32_0 = arith.constant 0 : i32
    %c0_i32_1 = arith.constant 0 : i32
    return %c0_i32, %c0_i32_0 : i32, i32
  }
}

module attributes {stable_mosaic.version = 11 : i64} {
  func.func @_core_dilate_kernel(%arg0: i32, %arg1: memref<32x144xbf16, #tpu.memory_space<vmem>>, %arg2: memref<144x64xbf16, #tpu.memory_space<vmem>>, %arg3: memref<1x64xf32, #tpu.memory_space<vmem>>, %arg4: memref<64x32xbf16, #tpu.memory_space<vmem>>, %arg5: memref<1x32xf32, #tpu.memory_space<vmem>>, %arg6: memref<32x32xbf16, #tpu.memory_space<vmem>>) attributes {dimension_semantics = [#tpu.dimension_semantics<arbitrary>], iteration_bounds = array<i64: 1>, scalar_prefetch = 0 : i64, scratch_operands = 0 : i64, tpu.core_type = #tpu.core_type<tc>, window_params = [{pipeline_mode = #tpu.pipeline_mode<synchronous>, transform_indices = @transform_0, window_bounds = array<i64: 32, 144>}, {pipeline_mode = #tpu.pipeline_mode<synchronous>, transform_indices = @transform_1, window_bounds = array<i64: 144, 64>}, {pipeline_mode = #tpu.pipeline_mode<synchronous>, transform_indices = @transform_2, window_bounds = array<i64: 1, 64>}, {pipeline_mode = #tpu.pipeline_mode<synchronous>, transform_indices = @transform_3, window_bounds = array<i64: 64, 32>}, {pipeline_mode = #tpu.pipeline_mode<synchronous>, transform_indices = @transform_4, window_bounds = array<i64: 1, 32>}, {pipeline_mode = #tpu.pipeline_mode<synchronous>, transform_indices = @transform_5, window_bounds = array<i64: 32, 32>}]} {
    %c0 = arith.constant 0 : index
    %c0_0 = arith.constant 0 : index
    %0 = vector.load %arg1[%c0, %c0_0] : memref<32x144xbf16, #tpu.memory_space<vmem>>, vector<32x144xbf16>
    %c0_1 = arith.constant 0 : index
    %c0_2 = arith.constant 0 : index
    %1 = vector.load %arg2[%c0_1, %c0_2] : memref<144x64xbf16, #tpu.memory_space<vmem>>, vector<144x64xbf16>
    %cst = arith.constant dense<0.000000e+00> : vector<32x64xf32>
    %2 = tpu.matmul %0, %1, %cst {dimension_numbers = #tpu.dot_dimension_numbers<[1], [0], [0], [1], [0, 0, 1, 1], [], []>} : vector<32x144xbf16>, vector<144x64xbf16>, vector<32x64xf32> -> vector<32x64xf32>
    %c0_3 = arith.constant 0 : index
    %c0_4 = arith.constant 0 : index
    %3 = vector.load %arg3[%c0_3, %c0_4] : memref<1x64xf32, #tpu.memory_space<vmem>>, vector<1x64xf32>
    %4 = vector.broadcast %3 : vector<1x64xf32> to vector<32x64xf32>
    %5 = arith.addf %2, %4 : vector<32x64xf32>
    %cst_5 = arith.constant 0.000000e+00 : f32
    %6 = vector.broadcast %cst_5 : f32 to vector<32x64xf32>
    %7 = arith.cmpf oge, %5, %6 : vector<32x64xf32>
    %cst_6 = arith.constant 2.000000e-01 : f32
    %8 = vector.broadcast %cst_6 : f32 to vector<32x64xf32>
    %9 = arith.mulf %8, %5 : vector<32x64xf32>
    %10 = arith.select %7, %5, %9 : vector<32x64xi1>, vector<32x64xf32>
    %11 = arith.truncf %10 : vector<32x64xf32> to vector<32x64xbf16>
    %c0_7 = arith.constant 0 : index
    %c0_8 = arith.constant 0 : index
    %12 = vector.load %arg4[%c0_7, %c0_8] : memref<64x32xbf16, #tpu.memory_space<vmem>>, vector<64x32xbf16>
    %cst_9 = arith.constant dense<0.000000e+00> : vector<32x32xf32>
    %13 = tpu.matmul %11, %12, %cst_9 {dimension_numbers = #tpu.dot_dimension_numbers<[1], [0], [0], [1], [0, 0, 1, 1], [], []>} : vector<32x64xbf16>, vector<64x32xbf16>, vector<32x32xf32> -> vector<32x32xf32>
    %c0_10 = arith.constant 0 : index
    %c0_11 = arith.constant 0 : index
    %14 = vector.load %arg5[%c0_10, %c0_11] : memref<1x32xf32, #tpu.memory_space<vmem>>, vector<1x32xf32>
    %15 = vector.broadcast %14 : vector<1x32xf32> to vector<32x32xf32>
    %16 = arith.addf %13, %15 : vector<32x32xf32>
    %cst_12 = arith.constant 0.000000e+00 : f32
    %17 = vector.broadcast %cst_12 : f32 to vector<32x32xf32>
    %18 = arith.cmpf oge, %16, %17 : vector<32x32xf32>
    %cst_13 = arith.constant 2.000000e-01 : f32
    %19 = vector.broadcast %cst_13 : f32 to vector<32x32xf32>
    %20 = arith.mulf %19, %16 : vector<32x32xf32>
    %21 = arith.select %18, %16, %20 : vector<32x32xi1>, vector<32x32xf32>
    %22 = arith.truncf %21 : vector<32x32xf32> to vector<32x32xbf16>
    %c0_14 = arith.constant 0 : index
    %c0_15 = arith.constant 0 : index
    %23 = vector.load %arg6[%c0_14, %c0_15] : memref<32x32xbf16, #tpu.memory_space<vmem>>, vector<32x32xbf16>
    tpu.vector_store %arg6[%c0_14, %c0_15], %22 {strides = array<i32>} : memref<32x32xbf16, #tpu.memory_space<vmem>>, vector<32x32xbf16>,
    return
  }
  func.func @transform_0(%arg0: i32) -> (i32, i32) {
    %c0_i32 = arith.constant 0 : i32
    %c0_i32_0 = arith.constant 0 : i32
    %c0_i32_1 = arith.constant 0 : i32
    return %c0_i32, %c0_i32_0 : i32, i32
  }
  func.func @transform_1(%arg0: i32) -> (i32, i32) {
    %c0_i32 = arith.constant 0 : i32
    %c0_i32_0 = arith.constant 0 : i32
    %c0_i32_1 = arith.constant 0 : i32
    return %c0_i32, %c0_i32_0 : i32, i32
  }
  func.func @transform_2(%arg0: i32) -> (i32, i32) {
    %c0_i32 = arith.constant 0 : i32
    %c0_i32_0 = arith.constant 0 : i32
    %c0_i32_1 = arith.constant 0 : i32
    return %c0_i32, %c0_i32_0 : i32, i32
  }
  func.func @transform_3(%arg0: i32) -> (i32, i32) {
    %c0_i32 = arith.constant 0 : i32
    %c0_i32_0 = arith.constant 0 : i32
    %c0_i32_1 = arith.constant 0 : i32
    return %c0_i32, %c0_i32_0 : i32, i32
  }
  func.func @transform_4(%arg0: i32) -> (i32, i32) {
    %c0_i32 = arith.constant 0 : i32
    %c0_i32_0 = arith.constant 0 : i32
    %c0_i32_1 = arith.constant 0 : i32
    return %c0_i32, %c0_i32_0 : i32, i32
  }
  func.func @transform_5(%arg0: i32) -> (i32, i32) {
    %c0_i32 = arith.constant 0 : i32
    %c0_i32_0 = arith.constant 0 : i32
    %c0_i32_1 = arith.constant 0 : i32
    return %c0_i32, %c0_i32_0 : i32, i32
  }
}

module attributes {stable_mosaic.version = 11 : i64} {
  func.func @_core_conv1_sigmoid_kernel(%arg0: i32, %arg1: memref<18x128xbf16, #tpu.memory_space<vmem>>, %arg2: memref<128x128xbf16, #tpu.memory_space<vmem>>, %arg3: memref<1x128xf32, #tpu.memory_space<vmem>>, %arg4: memref<1x512xf32, #tpu.memory_space<vmem>>, %arg5: memref<8x1xf32, #tpu.memory_space<vmem>>) attributes {dimension_semantics = [#tpu.dimension_semantics<arbitrary>], iteration_bounds = array<i64: 1>, scalar_prefetch = 0 : i64, scratch_operands = 0 : i64, tpu.core_type = #tpu.core_type<tc>, window_params = [{pipeline_mode = #tpu.pipeline_mode<synchronous>, transform_indices = @transform_0, window_bounds = array<i64: 18, 128>}, {pipeline_mode = #tpu.pipeline_mode<synchronous>, transform_indices = @transform_1, window_bounds = array<i64: 128, 128>}, {pipeline_mode = #tpu.pipeline_mode<synchronous>, transform_indices = @transform_2, window_bounds = array<i64: 1, 128>}, {pipeline_mode = #tpu.pipeline_mode<synchronous>, transform_indices = @transform_3, window_bounds = array<i64: 1, 512>}, {pipeline_mode = #tpu.pipeline_mode<synchronous>, transform_indices = @transform_4, window_bounds = array<i64: 8, 1>}]} {
    %c0 = arith.constant 0 : index
    %c0_0 = arith.constant 0 : index
    %0 = vector.load %arg1[%c0, %c0_0] : memref<18x128xbf16, #tpu.memory_space<vmem>>, vector<18x128xbf16>
    %c0_1 = arith.constant 0 : index
    %c0_2 = arith.constant 0 : index
    %1 = vector.load %arg2[%c0_1, %c0_2] : memref<128x128xbf16, #tpu.memory_space<vmem>>, vector<128x128xbf16>
    %cst = arith.constant dense<0.000000e+00> : vector<18x128xf32>
    %2 = tpu.matmul %0, %1, %cst {dimension_numbers = #tpu.dot_dimension_numbers<[1], [0], [0], [1], [0, 0, 1, 1], [], []>} : vector<18x128xbf16>, vector<128x128xbf16>, vector<18x128xf32> -> vector<18x128xf32>
    %c0_3 = arith.constant 0 : index
    %c0_4 = arith.constant 0 : index
    %3 = vector.load %arg3[%c0_3, %c0_4] : memref<1x128xf32, #tpu.memory_space<vmem>>, vector<1x128xf32>
    %4 = vector.broadcast %3 : vector<1x128xf32> to vector<18x128xf32>
    %5 = arith.addf %2, %4 : vector<18x128xf32>
    %cst_5 = arith.constant 0.000000e+00 : f32
    %6 = vector.broadcast %cst_5 : f32 to vector<18x128xf32>
    %7 = arith.cmpf oge, %5, %6 : vector<18x128xf32>
    %cst_6 = arith.constant 2.000000e-01 : f32
    %8 = vector.broadcast %cst_6 : f32 to vector<18x128xf32>
    %9 = arith.mulf %8, %5 : vector<18x128xf32>
    %10 = arith.select %7, %5, %9 : vector<18x128xi1>, vector<18x128xf32>
    %11 = vector.extract_strided_slice %10 {offsets = [0, 0], sizes = [1, 128], strides = [1, 1]} : vector<18x128xf32> to vector<1x128xf32>
    %12 = vector.extract_strided_slice %10 {offsets = [1, 0], sizes = [1, 128], strides = [1, 1]} : vector<18x128xf32> to vector<1x128xf32>
    %13 = vector.extract_strided_slice %10 {offsets = [3, 0], sizes = [1, 128], strides = [1, 1]} : vector<18x128xf32> to vector<1x128xf32>
    %14 = vector.extract_strided_slice %10 {offsets = [4, 0], sizes = [1, 128], strides = [1, 1]} : vector<18x128xf32> to vector<1x128xf32>
    %15 = tpu.concatenate %11, %12, %13, %14 in 1 : vector<1x128xf32>, vector<1x128xf32>, vector<1x128xf32>, vector<1x128xf32> -> vector<1x512xf32>
    %16 = vector.extract_strided_slice %10 {offsets = [1, 0], sizes = [1, 128], strides = [1, 1]} : vector<18x128xf32> to vector<1x128xf32>
    %17 = vector.extract_strided_slice %10 {offsets = [2, 0], sizes = [1, 128], strides = [1, 1]} : vector<18x128xf32> to vector<1x128xf32>
    %18 = vector.extract_strided_slice %10 {offsets = [4, 0], sizes = [1, 128], strides = [1, 1]} : vector<18x128xf32> to vector<1x128xf32>
    %19 = vector.extract_strided_slice %10 {offsets = [5, 0], sizes = [1, 128], strides = [1, 1]} : vector<18x128xf32> to vector<1x128xf32>
    %20 = tpu.concatenate %16, %17, %18, %19 in 1 : vector<1x128xf32>, vector<1x128xf32>, vector<1x128xf32>, vector<1x128xf32> -> vector<1x512xf32>
    %21 = vector.extract_strided_slice %10 {offsets = [3, 0], sizes = [1, 128], strides = [1, 1]} : vector<18x128xf32> to vector<1x128xf32>
    %22 = vector.extract_strided_slice %10 {offsets = [4, 0], sizes = [1, 128], strides = [1, 1]} : vector<18x128xf32> to vector<1x128xf32>
    %23 = vector.extract_strided_slice %10 {offsets = [6, 0], sizes = [1, 128], strides = [1, 1]} : vector<18x128xf32> to vector<1x128xf32>
    %24 = vector.extract_strided_slice %10 {offsets = [7, 0], sizes = [1, 128], strides = [1, 1]} : vector<18x128xf32> to vector<1x128xf32>
    %25 = tpu.concatenate %21, %22, %23, %24 in 1 : vector<1x128xf32>, vector<1x128xf32>, vector<1x128xf32>, vector<1x128xf32> -> vector<1x512xf32>
    %26 = vector.extract_strided_slice %10 {offsets = [4, 0], sizes = [1, 128], strides = [1, 1]} : vector<18x128xf32> to vector<1x128xf32>
    %27 = vector.extract_strided_slice %10 {offsets = [5, 0], sizes = [1, 128], strides = [1, 1]} : vector<18x128xf32> to vector<1x128xf32>
    %28 = vector.extract_strided_slice %10 {offsets = [7, 0], sizes = [1, 128], strides = [1, 1]} : vector<18x128xf32> to vector<1x128xf32>
    %29 = vector.extract_strided_slice %10 {offsets = [8, 0], sizes = [1, 128], strides = [1, 1]} : vector<18x128xf32> to vector<1x128xf32>
    %30 = tpu.concatenate %26, %27, %28, %29 in 1 : vector<1x128xf32>, vector<1x128xf32>, vector<1x128xf32>, vector<1x128xf32> -> vector<1x512xf32>
    %31 = vector.extract_strided_slice %10 {offsets = [9, 0], sizes = [1, 128], strides = [1, 1]} : vector<18x128xf32> to vector<1x128xf32>
    %32 = vector.extract_strided_slice %10 {offsets = [10, 0], sizes = [1, 128], strides = [1, 1]} : vector<18x128xf32> to vector<1x128xf32>
    %33 = vector.extract_strided_slice %10 {offsets = [12, 0], sizes = [1, 128], strides = [1, 1]} : vector<18x128xf32> to vector<1x128xf32>
    %34 = vector.extract_strided_slice %10 {offsets = [13, 0], sizes = [1, 128], strides = [1, 1]} : vector<18x128xf32> to vector<1x128xf32>
    %35 = tpu.concatenate %31, %32, %33, %34 in 1 : vector<1x128xf32>, vector<1x128xf32>, vector<1x128xf32>, vector<1x128xf32> -> vector<1x512xf32>
    %36 = vector.extract_strided_slice %10 {offsets = [10, 0], sizes = [1, 128], strides = [1, 1]} : vector<18x128xf32> to vector<1x128xf32>
    %37 = vector.extract_strided_slice %10 {offsets = [11, 0], sizes = [1, 128], strides = [1, 1]} : vector<18x128xf32> to vector<1x128xf32>
    %38 = vector.extract_strided_slice %10 {offsets = [13, 0], sizes = [1, 128], strides = [1, 1]} : vector<18x128xf32> to vector<1x128xf32>
    %39 = vector.extract_strided_slice %10 {offsets = [14, 0], sizes = [1, 128], strides = [1, 1]} : vector<18x128xf32> to vector<1x128xf32>
    %40 = tpu.concatenate %36, %37, %38, %39 in 1 : vector<1x128xf32>, vector<1x128xf32>, vector<1x128xf32>, vector<1x128xf32> -> vector<1x512xf32>
    %41 = vector.extract_strided_slice %10 {offsets = [12, 0], sizes = [1, 128], strides = [1, 1]} : vector<18x128xf32> to vector<1x128xf32>
    %42 = vector.extract_strided_slice %10 {offsets = [13, 0], sizes = [1, 128], strides = [1, 1]} : vector<18x128xf32> to vector<1x128xf32>
    %43 = vector.extract_strided_slice %10 {offsets = [15, 0], sizes = [1, 128], strides = [1, 1]} : vector<18x128xf32> to vector<1x128xf32>
    %44 = vector.extract_strided_slice %10 {offsets = [16, 0], sizes = [1, 128], strides = [1, 1]} : vector<18x128xf32> to vector<1x128xf32>
    %45 = tpu.concatenate %41, %42, %43, %44 in 1 : vector<1x128xf32>, vector<1x128xf32>, vector<1x128xf32>, vector<1x128xf32> -> vector<1x512xf32>
    %46 = vector.extract_strided_slice %10 {offsets = [13, 0], sizes = [1, 128], strides = [1, 1]} : vector<18x128xf32> to vector<1x128xf32>
    %47 = vector.extract_strided_slice %10 {offsets = [14, 0], sizes = [1, 128], strides = [1, 1]} : vector<18x128xf32> to vector<1x128xf32>
    %48 = vector.extract_strided_slice %10 {offsets = [16, 0], sizes = [1, 128], strides = [1, 1]} : vector<18x128xf32> to vector<1x128xf32>
    %49 = vector.extract_strided_slice %10 {offsets = [17, 0], sizes = [1, 128], strides = [1, 1]} : vector<18x128xf32> to vector<1x128xf32>
    %50 = tpu.concatenate %46, %47, %48, %49 in 1 : vector<1x128xf32>, vector<1x128xf32>, vector<1x128xf32>, vector<1x128xf32> -> vector<1x512xf32>
    %51 = tpu.concatenate %15, %20, %25, %30, %35, %40, %45, %50 in 0 : vector<1x512xf32>, vector<1x512xf32>, vector<1x512xf32>, vector<1x512xf32>, vector<1x512xf32>, vector<1x512xf32>, vector<1x512xf32>, vector<1x512xf32> -> vector<8x512xf32>
    %c0_7 = arith.constant 0 : index
    %c0_8 = arith.constant 0 : index
    %52 = vector.load %arg4[%c0_7, %c0_8] : memref<1x512xf32, #tpu.memory_space<vmem>>, vector<1x512xf32>
    %53 = vector.broadcast %52 : vector<1x512xf32> to vector<8x512xf32>
    %54 = arith.mulf %51, %53 : vector<8x512xf32>
    %cst_9 = arith.constant dense<0.000000e+00> : vector<8xf32>
    %55 = vector.multi_reduction <add>, %54, %cst_9 [1] : vector<8x512xf32> to vector<8xf32>
    %56 = vector.shape_cast %55 : vector<8xf32> to vector<8x1xf32>
    %cst_10 = arith.constant 5.000000e-01 : f32
    %57 = vector.broadcast %cst_10 : f32 to vector<8x1xf32>
    %58 = arith.mulf %57, %56 : vector<8x1xf32>
    %59 = math.tanh %58 : vector<8x1xf32>
    %cst_11 = arith.constant 1.000000e+00 : f32
    %60 = vector.broadcast %cst_11 : f32 to vector<8x1xf32>
    %61 = arith.addf %59, %60 : vector<8x1xf32>
    %cst_12 = arith.constant 5.000000e-01 : f32
    %62 = vector.broadcast %cst_12 : f32 to vector<8x1xf32>
    %63 = arith.mulf %62, %61 : vector<8x1xf32>
    %c0_13 = arith.constant 0 : index
    %c0_14 = arith.constant 0 : index
    %64 = vector.load %arg5[%c0_13, %c0_14] : memref<8x1xf32, #tpu.memory_space<vmem>>, vector<8x1xf32>
    tpu.vector_store %arg5[%c0_13, %c0_14], %63 {strides = array<i32>} : memref<8x1xf32, #tpu.memory_space<vmem>>, vector<8x1xf32>,
    return
  }
  func.func @transform_0(%arg0: i32) -> (i32, i32) {
    %c0_i32 = arith.constant 0 : i32
    %c0_i32_0 = arith.constant 0 : i32
    %c0_i32_1 = arith.constant 0 : i32
    return %c0_i32, %c0_i32_0 : i32, i32
  }
  func.func @transform_1(%arg0: i32) -> (i32, i32) {
    %c0_i32 = arith.constant 0 : i32
    %c0_i32_0 = arith.constant 0 : i32
    %c0_i32_1 = arith.constant 0 : i32
    return %c0_i32, %c0_i32_0 : i32, i32
  }
  func.func @transform_2(%arg0: i32) -> (i32, i32) {
    %c0_i32 = arith.constant 0 : i32
    %c0_i32_0 = arith.constant 0 : i32
    %c0_i32_1 = arith.constant 0 : i32
    return %c0_i32, %c0_i32_0 : i32, i32
  }
  func.func @transform_3(%arg0: i32) -> (i32, i32) {
    %c0_i32 = arith.constant 0 : i32
    %c0_i32_0 = arith.constant 0 : i32
    %c0_i32_1 = arith.constant 0 : i32
    return %c0_i32, %c0_i32_0 : i32, i32
  }
  func.func @transform_4(%arg0: i32) -> (i32, i32) {
    %c0_i32 = arith.constant 0 : i32
    %c0_i32_0 = arith.constant 0 : i32
    %c0_i32_1 = arith.constant 0 : i32
    return %c0_i32, %c0_i32_0 : i32, i32
  }
}

</mosaic_0001>

<llo_original>
// kernel: discriminator_forward.4
$region0: #{discriminator_forward.4}
  #allocation0 [shape = 'u32[]', space=smem, size = 0x4, offset = 0x4, fixed_abs, tag = 'smem constant byte address 0x4 - core index']
  #allocation1 [shape = 'u32[144,128]{1,0:T(1,128)}', space=vmem, size = 0x12000, scoped, tag = 'internal scratch']
  %s0 = inlined_call_operand.vmem [shape: bf16[512,27], index: 0, kind: input, shape index: {}]
  %s1 = inlined_call_operand.vmem [shape: bf16[27,8], index: 1, kind: input, shape index: {}]
  %s2 = inlined_call_operand.vmem [shape: f32[1,8], index: 2, kind: input, shape index: {}]
  %s3 = inlined_call_operand.vmem [shape: bf16[512,8], index: 3, kind: output, shape index: {}]
  %s4 = sld [smem:[#allocation0]]
  $region45: #{discriminator_forward.4} parent=0
    _
  %s6 = ssub.s32 1, %s4
  %s7 = scalar_select 0, %s6, %s4
  loop: start=0, step=1, limit=4
  $region2: #{discriminator_forward.4} parent=0 // loop_pre_header
    _
  $region3: #{discriminator_forward.4} parent=0 // loop_header
    %s9 = sphi 0, %s13
    %p10 = scmp.ge.s32.totalorder %s9, 4
    %s19 = sphi 0, %s21
    %s22 = sphi 0, %s19
    %s23 = sphi 0, %s22
    %s39 = sphi 0, %s23
    %s43 = sphi 0, %s43
    %s45 = sphi 0, %s43
    %s46 = sphi 0, %s45
    %s60 = sphi 0, %s46
    %s64 = sphi 0, %s64
    %s66 = sphi 0, %s64
    %s67 = sphi 0, %s66
    %s81 = sphi 0, %s67
    %s87 = sphi 0, %s89
    %s90 = sphi 0, %s87
    %s91 = sphi 0, %s90
    %s107 = sphi 0, %s91
  $region4: #{discriminator_forward.4} parent=0 // loop_header_branch
    %12 = sbr.rel (%p10) target = $region8
  $region5: #{discriminator_forward.4} parent=0 // loop_body
    %s14 = ssub.s32 %s9, 1
    %s15 = ssub.s32 %s9, 2
    %s16 = sadd.s32 %s9, 1
    %s17 = ssub.s32 %s9, %s16
    %p18 = scmp.eq.s32.totalorder %s17, 0
    %s20 = sadd.s32 %s19, 1
    %s21 = scalar_select %p18, %s19, %s20
    %p24 = pneg %p18
    %p25 = scmp.eq.s32.totalorder %s9, 1
    %p26 = por %p24, %p25
    %p27 = scmp.ne.s32.totalorder %s19, %s22
    %p28 = scmp.eq.s32.totalorder %s9, 0
    %p29 = por %p27, %p28
    %p30 = scmp.ne.s32.totalorder %s19, %s22
    %p31 = scmp.eq.s32.totalorder %s14, 1
    %p32 = por %p30, %p31
    %p33 = scmp.ne.s32.totalorder %s22, %s23
    %p34 = scmp.eq.s32.totalorder %s14, 0
    %p35 = por %p33, %p34
    %p36 = scmp.ne.s32.totalorder %s22, %s23
    %p37 = scmp.eq.s32.totalorder %s15, 1
    %p38 = por %p36, %p37
    %p40 = scmp.ne.s32.totalorder %s23, %s39
    %p41 = scmp.eq.s32.totalorder %s15, 0
    %p42 = por %p40, %p41
    %s44 = sadd.s32 %s43, 1
    %p47 = scmp.eq.s32.totalorder %s9, 1
    %p48 = scmp.ne.s32.totalorder %s43, %s45
    %p49 = scmp.eq.s32.totalorder %s9, 0
    %p50 = por %p48, %p49
    %p51 = scmp.ne.s32.totalorder %s43, %s45
    %p52 = scmp.eq.s32.totalorder %s14, 1
    %p53 = por %p51, %p52
    %p54 = scmp.ne.s32.totalorder %s45, %s46
    %p55 = scmp.eq.s32.totalorder %s14, 0
    %p56 = por %p54, %p55
    %p57 = scmp.ne.s32.totalorder %s45, %s46
    %p58 = scmp.eq.s32.totalorder %s15, 1
    %p59 = por %p57, %p58
    %p61 = scmp.ne.s32.totalorder %s46, %s60
    %p62 = scmp.eq.s32.totalorder %s15, 0
    %p63 = por %p61, %p62
    %s65 = sadd.s32 %s64, 1
    %p68 = scmp.eq.s32.totalorder %s9, 1
    %p69 = scmp.ne.s32.totalorder %s64, %s66
    %p70 = scmp.eq.s32.totalorder %s9, 0
    %p71 = por %p69, %p70
    %p72 = scmp.ne.s32.totalorder %s64, %s66
    %p73 = scmp.eq.s32.totalorder %s14, 1
    %p74 = por %p72, %p73
    %p75 = scmp.ne.s32.totalorder %s66, %s67
    %p76 = scmp.eq.s32.totalorder %s14, 0
    %p77 = por %p75, %p76
    %p78 = scmp.ne.s32.totalorder %s66, %s67
    %p79 = scmp.eq.s32.totalorder %s15, 1
    %p80 = por %p78, %p79
    %p82 = scmp.ne.s32.totalorder %s67, %s81
    %p83 = scmp.eq.s32.totalorder %s15, 0
    %p84 = por %p82, %p83
    %s85 = ssub.s32 %s9, %s16
    %p86 = scmp.eq.s32.totalorder %s85, 0
    %s88 = sadd.s32 %s87, 1
    %s89 = scalar_select %p86, %s87, %s88
    %p92 = pneg %p86
    %p93 = scmp.eq.s32.totalorder %s9, 1
    %p94 = por %p92, %p93
    %p95 = scmp.ne.s32.totalorder %s87, %s90
    %p96 = scmp.eq.s32.totalorder %s9, 0
    %p97 = por %p95, %p96
    %p98 = scmp.ne.s32.totalorder %s87, %s90
    %p99 = scmp.eq.s32.totalorder %s14, 1
    %p100 = por %p98, %p99
    %p101 = scmp.ne.s32.totalorder %s90, %s91
    %p102 = scmp.eq.s32.totalorder %s14, 0
    %p103 = por %p101, %p102
    %p104 = scmp.ne.s32.totalorder %s90, %s91
    %p105 = scmp.eq.s32.totalorder %s15, 1
    %p106 = por %p104, %p105
    %p108 = scmp.ne.s32.totalorder %s91, %s107
    %p109 = scmp.eq.s32.totalorder %s15, 0
    %p110 = por %p108, %p109
    %p111 = scmp.le.s32.totalorder 1, %s9
    %p112 = scmp.lt.s32.totalorder %s9, 3
    %p113 = pnand %p111, %p112
    %p114 = pneg %p113
    // Predicated region
    $region9: #{discriminator_forward.4} parent=5 // pred_check
      _
    $region10: #{discriminator_forward.4} parent=5 // pred_check_branch
      %116 = sbr.rel (%p113) target = $region12
    $region11: #{discriminator_forward.4} parent=5 // pred_region
      %s117 = ssub.s32 %s9, 1
      // Predicated region
      $region13: #{discriminator_forward.4} parent=11 // pred_check
        %p118 = pneg %p56
      $region14: #{discriminator_forward.4} parent=11 // pred_check_branch
        %120 = sbr.rel (%p118) target = $region16
      $region15: #{discriminator_forward.4} parent=11 // pred_region
        _
      $region16: #{discriminator_forward.4} parent=11 // pred_fallthru
        _
      // Predicated region
      $region17: #{discriminator_forward.4} parent=11 // pred_check
        %p121 = pneg %p77
      $region18: #{discriminator_forward.4} parent=11 // pred_check_branch
        %123 = sbr.rel (%p121) target = $region20
      $region19: #{discriminator_forward.4} parent=11 // pred_region
        _
      $region20: #{discriminator_forward.4} parent=11 // pred_fallthru
        _
    $region12: #{discriminator_forward.4} parent=5 // pred_fallthru
      _
    %p124 = scmp.lt.s32.totalorder %s9, 2
    // Predicated region
    $region21: #{discriminator_forward.4} parent=5 // pred_check
      %p125 = pneg %p124
    $region22: #{discriminator_forward.4} parent=5 // pred_check_branch
      %127 = sbr.rel (%p125) target = $region24
    $region23: #{discriminator_forward.4} parent=5 // pred_region
      // Predicated region
      $region25: #{discriminator_forward.4} parent=23 // pred_check
        %p128 = pneg %p29
      $region26: #{discriminator_forward.4} parent=23 // pred_check_branch
        %130 = sbr.rel (%p128) target = $region28
      $region27: #{discriminator_forward.4} parent=23 // pred_region
        %s131 = smul.u32 32, %s9
        %p132 = scmp.lt.s32.totalorder %s131, 63
        %s133 = scalar_select %p132, %s131, 63
        %s134 = smul.addr %s133, 4
        %s135 = scalar_lea.vmem %s0, %s134
        %s136 = smul.u32 32, %s9
      $region28: #{discriminator_forward.4} parent=23 // pred_fallthru
        _
    $region24: #{discriminator_forward.4} parent=5 // pred_fallthru
      _
    %p137 = scmp.le.s32.totalorder 1, %s9
    %p138 = scmp.lt.s32.totalorder %s9, 3
    %p139 = pnand %p137, %p138
    %p140 = pneg %p139
    // Predicated region
    $region29: #{discriminator_forward.4} parent=5 // pred_check
      _
    $region30: #{discriminator_forward.4} parent=5 // pred_check_branch
      %142 = sbr.rel (%p139) target = $region32
    $region31: #{discriminator_forward.4} parent=5 // pred_region
      %s143 = ssub.s32 %s9, 1
      %s144 = smul.u32 32, %s14
      %p145 = scmp.lt.s32.totalorder %s144, 63
      %s146 = scalar_select %p145, %s144, 63
      %s147 = smul.addr %s146, 4
      %s148 = scalar_lea.vmem %s0, %s147
      %p149 = pneg %p35
      %p150 = pneg %p32
      %p151 = pneg %p56
      %p152 = pneg %p53
      %p153 = pneg %p77
      %p154 = pneg %p74
      %p155 = pneg %p103
      %p156 = pneg %p100
      %s157 = smul.u32 32, %s14
      %p158 = scmp.lt.s32.totalorder %s157, 63
      %s159 = scalar_select %p158, %s157, 63
      %s160 = smul.addr %s159, 4
      %s161 = scalar_lea.vmem %s3, %s160
      %s162 = smul.u32 32, %s14
      %p163 = scmp.lt.s32.totalorder %s162, 63
      %s164 = scalar_select %p163, %s162, 63
      %s165 = smul.addr %s164, 4
      %s166 = scalar_lea.vmem %s0, %s165
      %s167 = smul.u32 32, %s14
      %s168 = smul.u32 32, %s14
      %p169 = scmp.lt.s32.totalorder %s168, 63
      %s170 = scalar_select %p169, %s168, 63
      %s171 = smul.addr %s170, 4
      %s172 = scalar_lea.vmem %s3, %s171
      %s173 = smul.u32 32, %s14
      %v175 = vld [vmem:[%s166] sm:$0xf]
      %v176 = vld [vmem:[%s166 + $0x4] sm:$0xf]
      %v177 = vld [vmem:[%s166 + $0x8] sm:$0xf]
      %v178 = vld [vmem:[%s166 + $0xc] sm:$0xf]
      %v179 = vld [vmem:[%s166 + $0x10] sm:$0xf]
      %v180 = vld [vmem:[%s166 + $0x14] sm:$0xf]
      %v181 = vld [vmem:[%s166 + $0x18] sm:$0xf]
      %v182 = vld [vmem:[%s166 + $0x1c] sm:$0xf]
      %v183 = vld [vmem:[%s166 + $0x20] sm:$0xf]
      %v184 = vld [vmem:[%s166 + $0x24] sm:$0xf]
      %v185 = vld [vmem:[%s166 + $0x28] sm:$0xf]
      %v186 = vld [vmem:[%s166 + $0x2c] sm:$0xf]
      %v187 = vld [vmem:[%s166 + $0x30] sm:$0xf]
      %v188 = vld [vmem:[%s166 + $0x34] sm:$0xf]
      %v189 = vld [vmem:[%s166 + $0x38] sm:$0xf]
      %v190 = vld [vmem:[%s166 + $0x3c] sm:$0xf]
      %v191 = vld [vmem:[%s166 + $0x40] sm:$0xf]
      %v192 = vld [vmem:[%s166 + $0x44] sm:$0xf]
      %v193 = vld [vmem:[%s166 + $0x48] sm:$0xf]
      %v194 = vld [vmem:[%s166 + $0x4c] sm:$0xf]
      %v195 = vld [vmem:[%s166 + $0x50] sm:$0xf]
      %v196 = vld [vmem:[%s166 + $0x54] sm:$0xf]
      %v197 = vld [vmem:[%s166 + $0x58] sm:$0xf]
      %v198 = vld [vmem:[%s166 + $0x5c] sm:$0xf]
      %v199 = vld [vmem:[%s166 + $0x60] sm:$0xf]
      %v200 = vld [vmem:[%s166 + $0x64] sm:$0xf]
      %v201 = vld [vmem:[%s166 + $0x68] sm:$0xf]
      %v202 = vld [vmem:[%s166 + $0x6c] sm:$0xf]
      %v203 = vld [vmem:[%s166 + $0x70] sm:$0xf]
      %v204 = vld [vmem:[%s166 + $0x74] sm:$0xf]
      %v205 = vld [vmem:[%s166 + $0x78] sm:$0xf]
      %v206 = vld [vmem:[%s166 + $0x7c] sm:$0xf]
      %v207 = vld [vmem:[%s1] sm:$0xf]
      %v208 = vld [vmem:[%s1 + $0x4] sm:$0xf]
      %v209 = vld [vmem:[%s1 + $0x8] sm:$0xf]
      %v210 = vld [vmem:[%s1 + $0xc] sm:$0x3]
      %v211 = vld [vmem:[%s2] sm:$0x1]
      %v213 = vlaneseq
      %v214 = vshrl.u32 %v213, 7
      %v215 = vsub.s32 0, %v214
      %v216 = vrot.slane %v211, %v215
      %v250 = vunpack.c.l.b16 %v175
      %v251 = vunpack.c.l.b16 %v176
      %v252 = vunpack.c.l.b16 %v177
      %v253 = vunpack.c.l.b16 %v178
      %v254 = vunpack.c.l.b16 %v179
      %v255 = vunpack.c.l.b16 %v180
      %v256 = vunpack.c.l.b16 %v181
      %v257 = vunpack.c.l.b16 %v182
      %v258 = vunpack.c.l.b16 %v183
      %v259 = vunpack.c.l.b16 %v184
      %v260 = vunpack.c.l.b16 %v185
      %v261 = vunpack.c.l.b16 %v186
      %v262 = vunpack.c.l.b16 %v187
      %v263 = vunpack.c.l.b16 %v188
      %v264 = vunpack.c.l.b16 %v189
      %v265 = vunpack.c.l.b16 %v190
      %v266 = vunpack.c.l.b16 %v191
      %v267 = vunpack.c.l.b16 %v192
      %v268 = vunpack.c.l.b16 %v193
      %v269 = vunpack.c.l.b16 %v194
      %v270 = vunpack.c.l.b16 %v195
      %v271 = vunpack.c.l.b16 %v196
      %v272 = vunpack.c.l.b16 %v197
      %v273 = vunpack.c.l.b16 %v198
      %v274 = vunpack.c.l.b16 %v199
      %v275 = vunpack.c.l.b16 %v200
      %v276 = vunpack.c.l.b16 %v201
      %v277 = vunpack.c.l.b16 %v202
      %v278 = vunpack.c.l.b16 %v203
      %v279 = vunpack.c.l.b16 %v204
      %v280 = vunpack.c.l.b16 %v205
      %v281 = vunpack.c.l.b16 %v206
      %v282 = vpack.c.b16 %v251, %v250
      %v283 = vpack.c.b16 %v253, %v252
      %v284 = vpack.c.b16 %v255, %v254
      %v285 = vpack.c.b16 %v257, %v256
      %v286 = vpack.c.b16 %v259, %v258
      %v287 = vpack.c.b16 %v261, %v260
      %v288 = vpack.c.b16 %v263, %v262
      %v289 = vpack.c.b16 %v265, %v264
      %v290 = vpack.c.b16 %v267, %v266
      %v291 = vpack.c.b16 %v269, %v268
      %v292 = vpack.c.b16 %v271, %v270
      %v293 = vpack.c.b16 %v273, %v272
      %v294 = vpack.c.b16 %v275, %v274
      %v295 = vpack.c.b16 %v277, %v276
      %v296 = vpack.c.b16 %v279, %v278
      %v297 = vpack.c.b16 %v281, %v280
      %v302 = vunpack.c.l.b16 %v207
      %v303 = vunpack.c.l.b16 %v208
      %v304 = vunpack.c.l.b16 %v209
      %v305 = vunpack.c.l.b16 %v210
      %v306 = vpack.c.b16 %v303, %v302
      %v307 = vpack.c.b16 %v305, %v304
      %vm309 = vcmask 220160
      %v311 = vsel %vm309, %v282, 0
      %v314 = vsel %vm309, %v283, 0
      %v317 = vsel %vm309, %v284, 0
      %v320 = vsel %vm309, %v285, 0
      %v323 = vsel %vm309, %v286, 0
      %v326 = vsel %vm309, %v287, 0
      %v329 = vsel %vm309, %v288, 0
      %v332 = vsel %vm309, %v289, 0
      %v335 = vsel %vm309, %v290, 0
      %v338 = vsel %vm309, %v291, 0
      %v341 = vsel %vm309, %v292, 0
      %v344 = vsel %vm309, %v293, 0
      %v347 = vsel %vm309, %v294, 0
      %v350 = vsel %vm309, %v295, 0
      %v353 = vsel %vm309, %v296, 0
      %v356 = vsel %vm309, %v297, 0
      %vm358 = vcmask 1044480
      %vm359 = vcmask 1045504
      %v360 = vsel %vm358, 4294967295, 65535
      %v361 = vsel %vm359, %v360, 0
      %v363 = vand.u32 %v307, %v361
      %365 = vmatprep.subr.bf16.mxu0 0
      %366 = vmatpush1.bf16.msra.mxu0 %v306
      %367 = vmatprep.subr.bf16.mxu0 0
      %368 = vmatpush1.bf16.msra.mxu0 %v363
      %369 = vmatprep.subr.bf16.mxu0 0
      %370 = vmatpush1.bf16.msra.mxu0 0
      %371 = vmatprep.subr.bf16.mxu0 0
      %372 = vmatpush1.bf16.msra.mxu0 0
      %373 = vmatprep.subr.bf16.mxu0 0
      %374 = vmatpush1.bf16.msra.mxu0 0
      %375 = vmatprep.subr.bf16.mxu0 0
      %376 = vmatpush1.bf16.msra.mxu0 0
      %377 = vmatprep.subr.bf16.mxu0 0
      %378 = vmatpush1.bf16.msra.mxu0 0
      %379 = vmatprep.subr.bf16.mxu0 0
      %380 = vmatpush1.bf16.msra.mxu0 0
      %381 = vmatprep.subr.bf16.mxu0 0
      %382 = vmatpush1.bf16.msra.mxu0 0
      %383 = vmatprep.subr.bf16.mxu0 0
      %384 = vmatpush1.bf16.msra.mxu0 0
      %385 = vmatprep.subr.bf16.mxu0 0
      %386 = vmatpush1.bf16.msra.mxu0 0
      %387 = vmatprep.subr.bf16.mxu0 0
      %388 = vmatpush1.bf16.msra.mxu0 0
      %389 = vmatprep.subr.bf16.mxu0 0
      %390 = vmatpush1.bf16.msra.mxu0 0
      %391 = vmatprep.subr.bf16.mxu0 0
      %392 = vmatpush1.bf16.msra.mxu0 0
      %393 = vmatprep.subr.bf16.mxu0 0
      %394 = vmatpush1.bf16.msra.mxu0 0
      %395 = vmatprep.subr.bf16.mxu0 0
      %396 = vmatpush1.bf16.msra.mxu0 0
      %397 = vmatprep.mubr.bf16.mxu0 0
      %398 = vmatmul.mubr.bf16.gmra.mrb[0].mxu0 %v311
      %v399 = vpop.f32.mrb[0].mxu0
      %v400 = vadd.f32 %v216, %v399
      %v401 = vpop.f32.mrb[0].mxu0
      %v402 = vpop.f32.mrb[0].mxu0
      %v403 = vadd.f32 %v216, %v402
      %v404 = vpop.f32.mrb[0].mxu0
      %405 = vmatprep.mubr.bf16.mxu0 0
      %406 = vmatmul.mubr.bf16.gmra.mrb[0].mxu0 %v314
      %v407 = vpop.f32.mrb[0].mxu0
      %v408 = vadd.f32 %v216, %v407
      %v409 = vpop.f32.mrb[0].mxu0
      %v410 = vpop.f32.mrb[0].mxu0
      %v411 = vadd.f32 %v216, %v410
      %v412 = vpop.f32.mrb[0].mxu0
      %413 = vmatprep.mubr.bf16.mxu0 0
      %414 = vmatmul.mubr.bf16.gmra.mrb[0].mxu0 %v317
      %v415 = vpop.f32.mrb[0].mxu0
      %v416 = vadd.f32 %v216, %v415
      %v417 = vpop.f32.mrb[0].mxu0
      %v418 = vpop.f32.mrb[0].mxu0
      %v419 = vadd.f32 %v216, %v418
      %v420 = vpop.f32.mrb[0].mxu0
      %421 = vmatprep.mubr.bf16.mxu0 0
      %422 = vmatmul.mubr.bf16.gmra.mrb[0].mxu0 %v320
      %v423 = vpop.f32.mrb[0].mxu0
      %v424 = vadd.f32 %v216, %v423
      %v425 = vpop.f32.mrb[0].mxu0
      %v426 = vpop.f32.mrb[0].mxu0
      %v427 = vadd.f32 %v216, %v426
      %v428 = vpop.f32.mrb[0].mxu0
      %429 = vmatprep.mubr.bf16.mxu0 0
      %430 = vmatmul.mubr.bf16.gmra.mrb[0].mxu0 %v323
      %v431 = vpop.f32.mrb[0].mxu0
      %v432 = vadd.f32 %v216, %v431
      %v433 = vpop.f32.mrb[0].mxu0
      %v434 = vpop.f32.mrb[0].mxu0
      %v435 = vadd.f32 %v216, %v434
      %v436 = vpop.f32.mrb[0].mxu0
      %437 = vmatprep.mubr.bf16.mxu0 0
      %438 = vmatmul.mubr.bf16.gmra.mrb[0].mxu0 %v326
      %v439 = vpop.f32.mrb[0].mxu0
      %v440 = vadd.f32 %v216, %v439
      %v441 = vpop.f32.mrb[0].mxu0
      %v442 = vpop.f32.mrb[0].mxu0
      %v443 = vadd.f32 %v216, %v442
      %v444 = vpop.f32.mrb[0].mxu0
      %445 = vmatprep.mubr.bf16.mxu0 0
      %446 = vmatmul.mubr.bf16.gmra.mrb[0].mxu0 %v329
      %v447 = vpop.f32.mrb[0].mxu0
      %v448 = vadd.f32 %v216, %v447
      %v449 = vpop.f32.mrb[0].mxu0
      %v450 = vpop.f32.mrb[0].mxu0
      %v451 = vadd.f32 %v216, %v450
      %v452 = vpop.f32.mrb[0].mxu0
      %453 = vmatprep.mubr.bf16.mxu0 0
      %454 = vmatmul.mubr.bf16.gmra.mrb[0].mxu0 %v332
      %v455 = vpop.f32.mrb[0].mxu0
      %v456 = vadd.f32 %v216, %v455
      %v457 = vpop.f32.mrb[0].mxu0
      %v458 = vpop.f32.mrb[0].mxu0
      %v459 = vadd.f32 %v216, %v458
      %v460 = vpop.f32.mrb[0].mxu0
      %461 = vmatprep.mubr.bf16.mxu0 0
      %462 = vmatmul.mubr.bf16.gmra.mrb[0].mxu0 %v335
      %v463 = vpop.f32.mrb[0].mxu0
      %v464 = vadd.f32 %v216, %v463
      %v465 = vpop.f32.mrb[0].mxu0
      %v466 = vpop.f32.mrb[0].mxu0
      %v467 = vadd.f32 %v216, %v466
      %v468 = vpop.f32.mrb[0].mxu0
      %469 = vmatprep.mubr.bf16.mxu0 0
      %470 = vmatmul.mubr.bf16.gmra.mrb[0].mxu0 %v338
      %v471 = vpop.f32.mrb[0].mxu0
      %v472 = vadd.f32 %v216, %v471
      %v473 = vpop.f32.mrb[0].mxu0
      %v474 = vpop.f32.mrb[0].mxu0
      %v475 = vadd.f32 %v216, %v474
      %v476 = vpop.f32.mrb[0].mxu0
      %477 = vmatprep.mubr.bf16.mxu0 0
      %478 = vmatmul.mubr.bf16.gmra.mrb[0].mxu0 %v341
      %v479 = vpop.f32.mrb[0].mxu0
      %v480 = vadd.f32 %v216, %v479
      %v481 = vpop.f32.mrb[0].mxu0
      %v482 = vpop.f32.mrb[0].mxu0
      %v483 = vadd.f32 %v216, %v482
      %v484 = vpop.f32.mrb[0].mxu0
      %485 = vmatprep.mubr.bf16.mxu0 0
      %486 = vmatmul.mubr.bf16.gmra.mrb[0].mxu0 %v344
      %v487 = vpop.f32.mrb[0].mxu0
      %v488 = vadd.f32 %v216, %v487
      %v489 = vpop.f32.mrb[0].mxu0
      %v490 = vpop.f32.mrb[0].mxu0
      %v491 = vadd.f32 %v216, %v490
      %v492 = vpop.f32.mrb[0].mxu0
      %493 = vmatprep.mubr.bf16.mxu0 0
      %494 = vmatmul.mubr.bf16.gmra.mrb[0].mxu0 %v347
      %v495 = vpop.f32.mrb[0].mxu0
      %v496 = vadd.f32 %v216, %v495
      %v497 = vpop.f32.mrb[0].mxu0
      %v498 = vpop.f32.mrb[0].mxu0
      %v499 = vadd.f32 %v216, %v498
      %v500 = vpop.f32.mrb[0].mxu0
      %501 = vmatprep.mubr.bf16.mxu0 0
      %502 = vmatmul.mubr.bf16.gmra.mrb[0].mxu0 %v350
      %v503 = vpop.f32.mrb[0].mxu0
      %v504 = vadd.f32 %v216, %v503
      %v505 = vpop.f32.mrb[0].mxu0
      %v506 = vpop.f32.mrb[0].mxu0
      %v507 = vadd.f32 %v216, %v506
      %v508 = vpop.f32.mrb[0].mxu0
      %509 = vmatprep.mubr.bf16.mxu0 0
      %510 = vmatmul.mubr.bf16.gmra.mrb[0].mxu0 %v353
      %v511 = vpop.f32.mrb[0].mxu0
      %v512 = vadd.f32 %v216, %v511
      %v513 = vpop.f32.mrb[0].mxu0
      %v514 = vpop.f32.mrb[0].mxu0
      %v515 = vadd.f32 %v216, %v514
      %v516 = vpop.f32.mrb[0].mxu0
      %517 = vmatprep.mubr.bf16.mxu0 0
      %518 = vmatmul.mubr.bf16.gmra.mrb[0].mxu0 %v356
      %v519 = vpop.f32.mrb[0].mxu0
      %v520 = vadd.f32 %v216, %v519
      %v521 = vpop.f32.mrb[0].mxu0
      %v522 = vpop.f32.mrb[0].mxu0
      %v523 = vadd.f32 %v216, %v522
      %v524 = vpop.f32.mrb[0].mxu0
      %525 = vdwg.mxu0
      %vm526 = vcmp.ge.f32.partialorder %v400, 0.0
      %vm527 = vcmp.ge.f32.partialorder %v403, 0.0
      %vm528 = vcmp.ge.f32.partialorder %v408, 0.0
      %vm529 = vcmp.ge.f32.partialorder %v411, 0.0
      %vm530 = vcmp.ge.f32.partialorder %v416, 0.0
      %vm531 = vcmp.ge.f32.partialorder %v419, 0.0
      %vm532 = vcmp.ge.f32.partialorder %v424, 0.0
      %vm533 = vcmp.ge.f32.partialorder %v427, 0.0
      %vm534 = vcmp.ge.f32.partialorder %v432, 0.0
      %vm535 = vcmp.ge.f32.partialorder %v435, 0.0
      %vm536 = vcmp.ge.f32.partialorder %v440, 0.0
      %vm537 = vcmp.ge.f32.partialorder %v443, 0.0
      %vm538 = vcmp.ge.f32.partialorder %v448, 0.0
      %vm539 = vcmp.ge.f32.partialorder %v451, 0.0
      %vm540 = vcmp.ge.f32.partialorder %v456, 0.0
      %vm541 = vcmp.ge.f32.partialorder %v459, 0.0
      %vm542 = vcmp.ge.f32.partialorder %v464, 0.0
      %vm543 = vcmp.ge.f32.partialorder %v467, 0.0
      %vm544 = vcmp.ge.f32.partialorder %v472, 0.0
      %vm545 = vcmp.ge.f32.partialorder %v475, 0.0
      %vm546 = vcmp.ge.f32.partialorder %v480, 0.0
      %vm547 = vcmp.ge.f32.partialorder %v483, 0.0
      %vm548 = vcmp.ge.f32.partialorder %v488, 0.0
      %vm549 = vcmp.ge.f32.partialorder %v491, 0.0
      %vm550 = vcmp.ge.f32.partialorder %v496, 0.0
      %vm551 = vcmp.ge.f32.partialorder %v499, 0.0
      %vm552 = vcmp.ge.f32.partialorder %v504, 0.0
      %vm553 = vcmp.ge.f32.partialorder %v507, 0.0
      %vm554 = vcmp.ge.f32.partialorder %v512, 0.0
      %vm555 = vcmp.ge.f32.partialorder %v515, 0.0
      %vm556 = vcmp.ge.f32.partialorder %v520, 0.0
      %vm557 = vcmp.ge.f32.partialorder %v523, 0.0
      %v558 = vmul.f32 %v400, 0.2
      %v559 = vmul.f32 %v403, 0.2
      %v560 = vmul.f32 %v408, 0.2
      %v561 = vmul.f32 %v411, 0.2
      %v562 = vmul.f32 %v416, 0.2
      %v563 = vmul.f32 %v419, 0.2
      %v564 = vmul.f32 %v424, 0.2
      %v565 = vmul.f32 %v427, 0.2
      %v566 = vmul.f32 %v432, 0.2
      %v567 = vmul.f32 %v435, 0.2
      %v568 = vmul.f32 %v440, 0.2
      %v569 = vmul.f32 %v443, 0.2
      %v570 = vmul.f32 %v448, 0.2
      %v571 = vmul.f32 %v451, 0.2
      %v572 = vmul.f32 %v456, 0.2
      %v573 = vmul.f32 %v459, 0.2
      %v574 = vmul.f32 %v464, 0.2
      %v575 = vmul.f32 %v467, 0.2
      %v576 = vmul.f32 %v472, 0.2
      %v577 = vmul.f32 %v475, 0.2
      %v578 = vmul.f32 %v480, 0.2
      %v579 = vmul.f32 %v483, 0.2
      %v580 = vmul.f32 %v488, 0.2
      %v581 = vmul.f32 %v491, 0.2
      %v582 = vmul.f32 %v496, 0.2
      %v583 = vmul.f32 %v499, 0.2
      %v584 = vmul.f32 %v504, 0.2
      %v585 = vmul.f32 %v507, 0.2
      %v586 = vmul.f32 %v512, 0.2
      %v587 = vmul.f32 %v515, 0.2
      %v588 = vmul.f32 %v520, 0.2
      %v589 = vmul.f32 %v523, 0.2
      %v590 = vsel %vm526, %v400, %v558
      %v591 = vsel %vm527, %v403, %v559
      %v592 = vsel %vm528, %v408, %v560
      %v593 = vsel %vm529, %v411, %v561
      %v594 = vsel %vm530, %v416, %v562
      %v595 = vsel %vm531, %v419, %v563
      %v596 = vsel %vm532, %v424, %v564
      %v597 = vsel %vm533, %v427, %v565
      %v598 = vsel %vm534, %v432, %v566
      %v599 = vsel %vm535, %v435, %v567
      %v600 = vsel %vm536, %v440, %v568
      %v601 = vsel %vm537, %v443, %v569
      %v602 = vsel %vm538, %v448, %v570
      %v603 = vsel %vm539, %v451, %v571
      %v604 = vsel %vm540, %v456, %v572
      %v605 = vsel %vm541, %v459, %v573
      %v606 = vsel %vm542, %v464, %v574
      %v607 = vsel %vm543, %v467, %v575
      %v608 = vsel %vm544, %v472, %v576
      %v609 = vsel %vm545, %v475, %v577
      %v610 = vsel %vm546, %v480, %v578
      %v611 = vsel %vm547, %v483, %v579
      %v612 = vsel %vm548, %v488, %v580
      %v613 = vsel %vm549, %v491, %v581
      %v614 = vsel %vm550, %v496, %v582
      %v615 = vsel %vm551, %v499, %v583
      %v616 = vsel %vm552, %v504, %v584
      %v617 = vsel %vm553, %v507, %v585
      %v618 = vsel %vm554, %v512, %v586
      %v619 = vsel %vm555, %v515, %v587
      %v620 = vsel %vm556, %v520, %v588
      %v621 = vsel %vm557, %v523, %v589
      %v622 = vpack.c.bf16 %v591, %v590
      %v623 = vpack.c.bf16 %v593, %v592
      %v624 = vpack.c.bf16 %v595, %v594
      %v625 = vpack.c.bf16 %v597, %v596
      %v626 = vpack.c.bf16 %v599, %v598
      %v627 = vpack.c.bf16 %v601, %v600
      %v628 = vpack.c.bf16 %v603, %v602
      %v629 = vpack.c.bf16 %v605, %v604
      %v630 = vpack.c.bf16 %v607, %v606
      %v631 = vpack.c.bf16 %v609, %v608
      %v632 = vpack.c.bf16 %v611, %v610
      %v633 = vpack.c.bf16 %v613, %v612
      %v634 = vpack.c.bf16 %v615, %v614
      %v635 = vpack.c.bf16 %v617, %v616
      %v636 = vpack.c.bf16 %v619, %v618
      %v637 = vpack.c.bf16 %v621, %v620
      %v654 = vunpack.c.l.b16 %v622
      %v655 = vunpack.c.h.b16 %v622
      %v656 = vunpack.c.l.b16 %v623
      %v657 = vunpack.c.h.b16 %v623
      %v658 = vunpack.c.l.b16 %v624
      %v659 = vunpack.c.h.b16 %v624
      %v660 = vunpack.c.l.b16 %v625
      %v661 = vunpack.c.h.b16 %v625
      %v662 = vunpack.c.l.b16 %v626
      %v663 = vunpack.c.h.b16 %v626
      %v664 = vunpack.c.l.b16 %v627
      %v665 = vunpack.c.h.b16 %v627
      %v666 = vunpack.c.l.b16 %v628
      %v667 = vunpack.c.h.b16 %v628
      %v668 = vunpack.c.l.b16 %v629
      %v669 = vunpack.c.h.b16 %v629
      %v670 = vunpack.c.l.b16 %v630
      %v671 = vunpack.c.h.b16 %v630
      %v672 = vunpack.c.l.b16 %v631
      %v673 = vunpack.c.h.b16 %v631
      %v674 = vunpack.c.l.b16 %v632
      %v675 = vunpack.c.h.b16 %v632
      %v676 = vunpack.c.l.b16 %v633
      %v677 = vunpack.c.h.b16 %v633
      %v678 = vunpack.c.l.b16 %v634
      %v679 = vunpack.c.h.b16 %v634
      %v680 = vunpack.c.l.b16 %v635
      %v681 = vunpack.c.h.b16 %v635
      %v682 = vunpack.c.l.b16 %v636
      %v683 = vunpack.c.h.b16 %v636
      %v684 = vunpack.c.l.b16 %v637
      %v685 = vunpack.c.h.b16 %v637
      %v686 = vpack.c.b16 %v654, %v654
      %v687 = vpack.c.b16 %v655, %v655
      %v688 = vpack.c.b16 %v656, %v656
      %v689 = vpack.c.b16 %v657, %v657
      %v690 = vpack.c.b16 %v658, %v658
      %v691 = vpack.c.b16 %v659, %v659
      %v692 = vpack.c.b16 %v660, %v660
      %v693 = vpack.c.b16 %v661, %v661
      %v694 = vpack.c.b16 %v662, %v662
      %v695 = vpack.c.b16 %v663, %v663
      %v696 = vpack.c.b16 %v664, %v664
      %v697 = vpack.c.b16 %v665, %v665
      %v698 = vpack.c.b16 %v666, %v666
      %v699 = vpack.c.b16 %v667, %v667
      %v700 = vpack.c.b16 %v668, %v668
      %v701 = vpack.c.b16 %v669, %v669
      %v702 = vpack.c.b16 %v670, %v670
      %v703 = vpack.c.b16 %v671, %v671
      %v704 = vpack.c.b16 %v672, %v672
      %v705 = vpack.c.b16 %v673, %v673
      %v706 = vpack.c.b16 %v674, %v674
      %v707 = vpack.c.b16 %v675, %v675
      %v708 = vpack.c.b16 %v676, %v676
      %v709 = vpack.c.b16 %v677, %v677
      %v710 = vpack.c.b16 %v678, %v678
      %v711 = vpack.c.b16 %v679, %v679
      %v712 = vpack.c.b16 %v680, %v680
      %v713 = vpack.c.b16 %v681, %v681
      %v714 = vpack.c.b16 %v682, %v682
      %v715 = vpack.c.b16 %v683, %v683
      %v716 = vpack.c.b16 %v684, %v684
      %v717 = vpack.c.b16 %v685, %v685
      %vm750 = vcmask 60416
      %751 = vst.msk [vmem:[%s172] sm:$0xf] %vm750, %v686
      %752 = vst.msk [vmem:[%s172 + $0x4] sm:$0xf] %vm750, %v687
      %753 = vst.msk [vmem:[%s172 + $0x8] sm:$0xf] %vm750, %v688
      %754 = vst.msk [vmem:[%s172 + $0xc] sm:$0xf] %vm750, %v689
      %755 = vst.msk [vmem:[%s172 + $0x10] sm:$0xf] %vm750, %v690
      %756 = vst.msk [vmem:[%s172 + $0x14] sm:$0xf] %vm750, %v691
      %757 = vst.msk [vmem:[%s172 + $0x18] sm:$0xf] %vm750, %v692
      %758 = vst.msk [vmem:[%s172 + $0x1c] sm:$0xf] %vm750, %v693
      %759 = vst.msk [vmem:[%s172 + $0x20] sm:$0xf] %vm750, %v694
      %760 = vst.msk [vmem:[%s172 + $0x24] sm:$0xf] %vm750, %v695
      %761 = vst.msk [vmem:[%s172 + $0x28] sm:$0xf] %vm750, %v696
      %762 = vst.msk [vmem:[%s172 + $0x2c] sm:$0xf] %vm750, %v697
      %763 = vst.msk [vmem:[%s172 + $0x30] sm:$0xf] %vm750, %v698
      %764 = vst.msk [vmem:[%s172 + $0x34] sm:$0xf] %vm750, %v699
      %765 = vst.msk [vmem:[%s172 + $0x38] sm:$0xf] %vm750, %v700
      %766 = vst.msk [vmem:[%s172 + $0x3c] sm:$0xf] %vm750, %v701
      %767 = vst.msk [vmem:[%s172 + $0x40] sm:$0xf] %vm750, %v702
      %768 = vst.msk [vmem:[%s172 + $0x44] sm:$0xf] %vm750, %v703
      %769 = vst.msk [vmem:[%s172 + $0x48] sm:$0xf] %vm750, %v704
      %770 = vst.msk [vmem:[%s172 + $0x4c] sm:$0xf] %vm750, %v705
      %771 = vst.msk [vmem:[%s172 + $0x50] sm:$0xf] %vm750, %v706
      %772 = vst.msk [vmem:[%s172 + $0x54] sm:$0xf] %vm750, %v707
      %773 = vst.msk [vmem:[%s172 + $0x58] sm:$0xf] %vm750, %v708
      %774 = vst.msk [vmem:[%s172 + $0x5c] sm:$0xf] %vm750, %v709
      %775 = vst.msk [vmem:[%s172 + $0x60] sm:$0xf] %vm750, %v710
      %776 = vst.msk [vmem:[%s172 + $0x64] sm:$0xf] %vm750, %v711
      %777 = vst.msk [vmem:[%s172 + $0x68] sm:$0xf] %vm750, %v712
      %778 = vst.msk [vmem:[%s172 + $0x6c] sm:$0xf] %vm750, %v713
      %779 = vst.msk [vmem:[%s172 + $0x70] sm:$0xf] %vm750, %v714
      %780 = vst.msk [vmem:[%s172 + $0x74] sm:$0xf] %vm750, %v715
      %781 = vst.msk [vmem:[%s172 + $0x78] sm:$0xf] %vm750, %v716
      %782 = vst.msk [vmem:[%s172 + $0x7c] sm:$0xf] %vm750, %v717
      %s783 = smul.u32 32, %s14
      %p784 = scmp.lt.s32.totalorder %s783, 63
      %s785 = scalar_select %p784, %s783, 63
      %s786 = smul.addr %s785, 4
      %s787 = scalar_lea.vmem %s3, %s786
      // Predicated region
      $region33: #{discriminator_forward.4} parent=31 // pred_check
        %p788 = pneg %p100
      $region34: #{discriminator_forward.4} parent=31 // pred_check_branch
        %790 = sbr.rel (%p788) target = $region36
      $region35: #{discriminator_forward.4} parent=31 // pred_region
        %s791 = smul.u32 32, %s14
      $region36: #{discriminator_forward.4} parent=31 // pred_fallthru
        _
    $region32: #{discriminator_forward.4} parent=5 // pred_fallthru
      _
    %p792 = scmp.le.s32.totalorder 2, %s9
    // Predicated region
    $region37: #{discriminator_forward.4} parent=5 // pred_check
      %p793 = pneg %p792
    $region38: #{discriminator_forward.4} parent=5 // pred_check_branch
      %795 = sbr.rel (%p793) target = $region40
    $region39: #{discriminator_forward.4} parent=5 // pred_region
      %s796 = ssub.s32 %s9, 2
      // Predicated region
      $region41: #{discriminator_forward.4} parent=39 // pred_check
        %p797 = pneg %p106
      $region42: #{discriminator_forward.4} parent=39 // pred_check_branch
        %799 = sbr.rel (%p797) target = $region44
      $region43: #{discriminator_forward.4} parent=39 // pred_region
        %s800 = smul.u32 32, %s15
        %p801 = scmp.lt.s32.totalorder %s800, 63
        %s802 = scalar_select %p801, %s800, 63
        %s803 = smul.addr %s802, 4
        %s804 = scalar_lea.vmem %s3, %s803
      $region44: #{discriminator_forward.4} parent=39 // pred_fallthru
        _
    $region40: #{discriminator_forward.4} parent=5 // pred_fallthru
      _
  $region6: #{discriminator_forward.4} parent=0 // loop_footer
    %s13 = sadd.s32 1, %s9
  $region7: #{discriminator_forward.4} parent=0 // loop_footer_branch
    %8 = sbr.rel target = $region3
  $region8: #{discriminator_forward.4} parent=0 // loop_exit
    _

// kernel: discriminator_forward.5
$region0: #{discriminator_forward.5}
  #allocation0 [shape = 'u32[]', space=smem, size = 0x4, offset = 0x4, fixed_abs, tag = 'smem constant byte address 0x4 - core index']
  #allocation1 [shape = 'u32[144,128]{1,0:T(1,128)}', space=vmem, size = 0x12000, scoped, tag = 'internal scratch']
  %s0 = inlined_call_operand.vmem [shape: bf16[128,72], index: 0, kind: input, shape index: {}]
  %s1 = inlined_call_operand.vmem [shape: bf16[72,32], index: 1, kind: input, shape index: {}]
  %s2 = inlined_call_operand.vmem [shape: f32[1,32], index: 2, kind: input, shape index: {}]
  %s3 = inlined_call_operand.vmem [shape: bf16[32,16], index: 3, kind: input, shape index: {}]
  %s4 = inlined_call_operand.vmem [shape: f32[1,16], index: 4, kind: input, shape index: {}]
  %s5 = inlined_call_operand.vmem [shape: bf16[128,16], index: 5, kind: output, shape index: {}]
  %s6 = sld [smem:[#allocation0]]
  $region30: #{discriminator_forward.5} parent=0
    _
  %s8 = ssub.s32 1, %s6
  %s9 = scalar_select 0, %s8, %s6
  // Predicated region
  $region2: #{discriminator_forward.5} parent=0 // pred_check
    _
  $region3: #{discriminator_forward.5} parent=0 // pred_check_branch
    %11 = sbr.rel (0) target = $region5
  $region4: #{discriminator_forward.5} parent=0 // pred_region
    _
  $region5: #{discriminator_forward.5} parent=0 // pred_fallthru
    _
  // Predicated region
  $region6: #{discriminator_forward.5} parent=0 // pred_check
    _
  $region7: #{discriminator_forward.5} parent=0 // pred_check_branch
    %13 = sbr.rel (0) target = $region9
  $region8: #{discriminator_forward.5} parent=0 // pred_region
    _
  $region9: #{discriminator_forward.5} parent=0 // pred_fallthru
    _
  // Predicated region
  $region10: #{discriminator_forward.5} parent=0 // pred_check
    _
  $region11: #{discriminator_forward.5} parent=0 // pred_check_branch
    %15 = sbr.rel (0) target = $region13
  $region12: #{discriminator_forward.5} parent=0 // pred_region
    _
  $region13: #{discriminator_forward.5} parent=0 // pred_fallthru
    _
  // Predicated region
  $region14: #{discriminator_forward.5} parent=0 // pred_check
    _
  $region15: #{discriminator_forward.5} parent=0 // pred_check_branch
    %17 = sbr.rel (0) target = $region17
  $region16: #{discriminator_forward.5} parent=0 // pred_region
    _
  $region17: #{discriminator_forward.5} parent=0 // pred_fallthru
    _
  // Predicated region
  $region18: #{discriminator_forward.5} parent=0 // pred_check
    _
  $region19: #{discriminator_forward.5} parent=0 // pred_check_branch
    %19 = sbr.rel (0) target = $region21
  $region20: #{discriminator_forward.5} parent=0 // pred_region
    _
  $region21: #{discriminator_forward.5} parent=0 // pred_fallthru
    _
  %v21 = vld [vmem:[%s0] sm:$0xf]
  %v22 = vld [vmem:[%s0 + $0x4] sm:$0xf]
  %v23 = vld [vmem:[%s0 + $0x8] sm:$0xf]
  %v24 = vld [vmem:[%s0 + $0xc] sm:$0xf]
  %v25 = vld [vmem:[%s0 + $0x10] sm:$0xf]
  %v26 = vld [vmem:[%s0 + $0x14] sm:$0xf]
  %v27 = vld [vmem:[%s0 + $0x18] sm:$0xf]
  %v28 = vld [vmem:[%s0 + $0x1c] sm:$0xf]
  %v29 = vld [vmem:[%s0 + $0x20] sm:$0xf]
  %v30 = vld [vmem:[%s0 + $0x24] sm:$0xf]
  %v31 = vld [vmem:[%s0 + $0x28] sm:$0xf]
  %v32 = vld [vmem:[%s0 + $0x2c] sm:$0xf]
  %v33 = vld [vmem:[%s0 + $0x30] sm:$0xf]
  %v34 = vld [vmem:[%s0 + $0x34] sm:$0xf]
  %v35 = vld [vmem:[%s0 + $0x38] sm:$0xf]
  %v36 = vld [vmem:[%s0 + $0x3c] sm:$0xf]
  %v37 = vld [vmem:[%s1] sm:$0xf]
  %v38 = vld [vmem:[%s1 + $0x4] sm:$0xf]
  %v39 = vld [vmem:[%s1 + $0x8] sm:$0xf]
  %v40 = vld [vmem:[%s1 + $0xc] sm:$0xf]
  %v41 = vld [vmem:[%s1 + $0x10] sm:$0xf]
  %v42 = vld [vmem:[%s1 + $0x14] sm:$0xf]
  %v43 = vld [vmem:[%s1 + $0x18] sm:$0xf]
  %v44 = vld [vmem:[%s1 + $0x1c] sm:$0xf]
  %v45 = vld [vmem:[%s1 + $0x20] sm:$0xf]
  %v46 = vld [vmem:[%s2] sm:$0x1]
  %v48 = vlaneseq
  %v49 = vshrl.u32 %v48, 7
  %v50 = vsub.s32 0, %v49
  %v51 = vrot.slane %v46, %v50
  %v69 = vunpack.c.l.b16 %v21
  %v70 = vunpack.c.l.b16 %v22
  %v71 = vunpack.c.l.b16 %v23
  %v72 = vunpack.c.l.b16 %v24
  %v73 = vunpack.c.l.b16 %v25
  %v74 = vunpack.c.l.b16 %v26
  %v75 = vunpack.c.l.b16 %v27
  %v76 = vunpack.c.l.b16 %v28
  %v77 = vunpack.c.l.b16 %v29
  %v78 = vunpack.c.l.b16 %v30
  %v79 = vunpack.c.l.b16 %v31
  %v80 = vunpack.c.l.b16 %v32
  %v81 = vunpack.c.l.b16 %v33
  %v82 = vunpack.c.l.b16 %v34
  %v83 = vunpack.c.l.b16 %v35
  %v84 = vunpack.c.l.b16 %v36
  %v85 = vpack.c.b16 %v70, %v69
  %v86 = vpack.c.b16 %v72, %v71
  %v87 = vpack.c.b16 %v74, %v73
  %v88 = vpack.c.b16 %v76, %v75
  %v89 = vpack.c.b16 %v78, %v77
  %v90 = vpack.c.b16 %v80, %v79
  %v91 = vpack.c.b16 %v82, %v81
  %v92 = vpack.c.b16 %v84, %v83
  %v102 = vunpack.c.l.b16 %v37
  %v103 = vunpack.c.l.b16 %v38
  %v104 = vunpack.c.l.b16 %v39
  %v105 = vunpack.c.l.b16 %v40
  %v106 = vunpack.c.l.b16 %v41
  %v107 = vunpack.c.l.b16 %v42
  %v108 = vunpack.c.l.b16 %v43
  %v109 = vunpack.c.l.b16 %v44
  %v110 = vunpack.c.l.b16 %v45
  %v111 = vpack.c.b16 %v103, %v102
  %v112 = vpack.c.b16 %v105, %v104
  %v113 = vpack.c.b16 %v107, %v106
  %v114 = vpack.c.b16 %v109, %v108
  %v115 = vpack.c.b16 %v110, %v110
  %vm120 = vcmask 588800
  %v122 = vsel %vm120, %v85, 0
  %v125 = vsel %vm120, %v86, 0
  %v128 = vsel %vm120, %v87, 0
  %v131 = vsel %vm120, %v88, 0
  %v134 = vsel %vm120, %v89, 0
  %v137 = vsel %vm120, %v90, 0
  %v140 = vsel %vm120, %v91, 0
  %v143 = vsel %vm120, %v92, 0
  %vm145 = vcmask 1043456
  %v147 = vsel %vm145, %v115, 0
  %149 = vmatprep.subr.bf16.mxu0 0
  %150 = vmatpush1.bf16.msra.mxu0 %v111
  %151 = vmatprep.subr.bf16.mxu0 0
  %152 = vmatpush1.bf16.msra.mxu0 %v112
  %153 = vmatprep.subr.bf16.mxu0 0
  %154 = vmatpush1.bf16.msra.mxu0 %v113
  %155 = vmatprep.subr.bf16.mxu0 0
  %156 = vmatpush1.bf16.msra.mxu0 %v114
  %157 = vmatprep.subr.bf16.mxu0 0
  %158 = vmatpush1.bf16.msra.mxu0 %v147
  %159 = vmatprep.subr.bf16.mxu0 0
  %160 = vmatpush1.bf16.msra.mxu0 0
  %161 = vmatprep.subr.bf16.mxu0 0
  %162 = vmatpush1.bf16.msra.mxu0 0
  %163 = vmatprep.subr.bf16.mxu0 0
  %164 = vmatpush1.bf16.msra.mxu0 0
  %165 = vmatprep.subr.bf16.mxu0 0
  %166 = vmatpush1.bf16.msra.mxu0 0
  %167 = vmatprep.subr.bf16.mxu0 0
  %168 = vmatpush1.bf16.msra.mxu0 0
  %169 = vmatprep.subr.bf16.mxu0 0
  %170 = vmatpush1.bf16.msra.mxu0 0
  %171 = vmatprep.subr.bf16.mxu0 0
  %172 = vmatpush1.bf16.msra.mxu0 0
  %173 = vmatprep.subr.bf16.mxu0 0
  %174 = vmatpush1.bf16.msra.mxu0 0
  %175 = vmatprep.subr.bf16.mxu0 0
  %176 = vmatpush1.bf16.msra.mxu0 0
  %177 = vmatprep.subr.bf16.mxu0 0
  %178 = vmatpush1.bf16.msra.mxu0 0
  %179 = vmatprep.subr.bf16.mxu0 0
  %180 = vmatpush1.bf16.msra.mxu0 0
  %181 = vmatprep.mubr.bf16.mxu0 0
  %182 = vmatmul.mubr.bf16.gmra.mrb[0].mxu0 %v122
  %v183 = vpop.f32.mrb[0].mxu0
  %v184 = vadd.f32 %v51, %v183
  %v185 = vpop.f32.mrb[0].mxu0
  %v186 = vpop.f32.mrb[0].mxu0
  %v187 = vadd.f32 %v51, %v186
  %v188 = vpop.f32.mrb[0].mxu0
  %189 = vmatprep.mubr.bf16.mxu0 0
  %190 = vmatmul.mubr.bf16.gmra.mrb[0].mxu0 %v125
  %v191 = vpop.f32.mrb[0].mxu0
  %v192 = vadd.f32 %v51, %v191
  %v193 = vpop.f32.mrb[0].mxu0
  %v194 = vpop.f32.mrb[0].mxu0
  %v195 = vadd.f32 %v51, %v194
  %v196 = vpop.f32.mrb[0].mxu0
  %197 = vmatprep.mubr.bf16.mxu0 0
  %198 = vmatmul.mubr.bf16.gmra.mrb[0].mxu0 %v128
  %v199 = vpop.f32.mrb[0].mxu0
  %v200 = vadd.f32 %v51, %v199
  %v201 = vpop.f32.mrb[0].mxu0
  %v202 = vpop.f32.mrb[0].mxu0
  %v203 = vadd.f32 %v51, %v202
  %v204 = vpop.f32.mrb[0].mxu0
  %205 = vmatprep.mubr.bf16.mxu0 0
  %206 = vmatmul.mubr.bf16.gmra.mrb[0].mxu0 %v131
  %v207 = vpop.f32.mrb[0].mxu0
  %v208 = vadd.f32 %v51, %v207
  %v209 = vpop.f32.mrb[0].mxu0
  %v210 = vpop.f32.mrb[0].mxu0
  %v211 = vadd.f32 %v51, %v210
  %v212 = vpop.f32.mrb[0].mxu0
  %213 = vmatprep.mubr.bf16.mxu0 0
  %214 = vmatmul.mubr.bf16.gmra.mrb[0].mxu0 %v134
  %v215 = vpop.f32.mrb[0].mxu0
  %v216 = vadd.f32 %v51, %v215
  %v217 = vpop.f32.mrb[0].mxu0
  %v218 = vpop.f32.mrb[0].mxu0
  %v219 = vadd.f32 %v51, %v218
  %v220 = vpop.f32.mrb[0].mxu0
  %221 = vmatprep.mubr.bf16.mxu0 0
  %222 = vmatmul.mubr.bf16.gmra.mrb[0].mxu0 %v137
  %v223 = vpop.f32.mrb[0].mxu0
  %v224 = vadd.f32 %v51, %v223
  %v225 = vpop.f32.mrb[0].mxu0
  %v226 = vpop.f32.mrb[0].mxu0
  %v227 = vadd.f32 %v51, %v226
  %v228 = vpop.f32.mrb[0].mxu0
  %229 = vmatprep.mubr.bf16.mxu0 0
  %230 = vmatmul.mubr.bf16.gmra.mrb[0].mxu0 %v140
  %v231 = vpop.f32.mrb[0].mxu0
  %v232 = vadd.f32 %v51, %v231
  %v233 = vpop.f32.mrb[0].mxu0
  %v234 = vpop.f32.mrb[0].mxu0
  %v235 = vadd.f32 %v51, %v234
  %v236 = vpop.f32.mrb[0].mxu0
  %237 = vmatprep.mubr.bf16.mxu0 0
  %238 = vmatmul.mubr.bf16.gmra.mrb[0].mxu0 %v143
  %v239 = vpop.f32.mrb[0].mxu0
  %v240 = vadd.f32 %v51, %v239
  %v241 = vpop.f32.mrb[0].mxu0
  %v242 = vpop.f32.mrb[0].mxu0
  %v243 = vadd.f32 %v51, %v242
  %v244 = vpop.f32.mrb[0].mxu0
  %245 = vdwg.mxu0
  %vm246 = vcmp.ge.f32.partialorder %v184, 0.0
  %vm247 = vcmp.ge.f32.partialorder %v187, 0.0
  %vm248 = vcmp.ge.f32.partialorder %v192, 0.0
  %vm249 = vcmp.ge.f32.partialorder %v195, 0.0
  %vm250 = vcmp.ge.f32.partialorder %v200, 0.0
  %vm251 = vcmp.ge.f32.partialorder %v203, 0.0
  %vm252 = vcmp.ge.f32.partialorder %v208, 0.0
  %vm253 = vcmp.ge.f32.partialorder %v211, 0.0
  %vm254 = vcmp.ge.f32.partialorder %v216, 0.0
  %vm255 = vcmp.ge.f32.partialorder %v219, 0.0
  %vm256 = vcmp.ge.f32.partialorder %v224, 0.0
  %vm257 = vcmp.ge.f32.partialorder %v227, 0.0
  %vm258 = vcmp.ge.f32.partialorder %v232, 0.0
  %vm259 = vcmp.ge.f32.partialorder %v235, 0.0
  %vm260 = vcmp.ge.f32.partialorder %v240, 0.0
  %vm261 = vcmp.ge.f32.partialorder %v243, 0.0
  %v262 = vmul.f32 %v184, 0.2
  %v263 = vmul.f32 %v187, 0.2
  %v264 = vmul.f32 %v192, 0.2
  %v265 = vmul.f32 %v195, 0.2
  %v266 = vmul.f32 %v200, 0.2
  %v267 = vmul.f32 %v203, 0.2
  %v268 = vmul.f32 %v208, 0.2
  %v269 = vmul.f32 %v211, 0.2
  %v270 = vmul.f32 %v216, 0.2
  %v271 = vmul.f32 %v219, 0.2
  %v272 = vmul.f32 %v224, 0.2
  %v273 = vmul.f32 %v227, 0.2
  %v274 = vmul.f32 %v232, 0.2
  %v275 = vmul.f32 %v235, 0.2
  %v276 = vmul.f32 %v240, 0.2
  %v277 = vmul.f32 %v243, 0.2
  %v278 = vsel %vm246, %v184, %v262
  %v279 = vsel %vm247, %v187, %v263
  %v280 = vsel %vm248, %v192, %v264
  %v281 = vsel %vm249, %v195, %v265
  %v282 = vsel %vm250, %v200, %v266
  %v283 = vsel %vm251, %v203, %v267
  %v284 = vsel %vm252, %v208, %v268
  %v285 = vsel %vm253, %v211, %v269
  %v286 = vsel %vm254, %v216, %v270
  %v287 = vsel %vm255, %v219, %v271
  %v288 = vsel %vm256, %v224, %v272
  %v289 = vsel %vm257, %v227, %v273
  %v290 = vsel %vm258, %v232, %v274
  %v291 = vsel %vm259, %v235, %v275
  %v292 = vsel %vm260, %v240, %v276
  %v293 = vsel %vm261, %v243, %v277
  %v294 = vpack.c.bf16 %v279, %v278
  %v295 = vpack.c.bf16 %v281, %v280
  %v296 = vpack.c.bf16 %v283, %v282
  %v297 = vpack.c.bf16 %v285, %v284
  %v298 = vpack.c.bf16 %v287, %v286
  %v299 = vpack.c.bf16 %v289, %v288
  %v300 = vpack.c.bf16 %v291, %v290
  %v301 = vpack.c.bf16 %v293, %v292
  %v302 = vld [vmem:[%s3] sm:$0xf]
  %v303 = vld [vmem:[%s3 + $0x4] sm:$0xf]
  %v304 = vld [vmem:[%s3 + $0x8] sm:$0xf]
  %v305 = vld [vmem:[%s3 + $0xc] sm:$0xf]
  %v306 = vld [vmem:[%s4] sm:$0x1]
  %v308 = vlaneseq
  %v309 = vshrl.u32 %v308, 7
  %v310 = vsub.s32 0, %v309
  %v311 = vrot.slane %v306, %v310
  %v317 = vunpack.c.l.b16 %v302
  %v318 = vunpack.c.l.b16 %v303
  %v319 = vunpack.c.l.b16 %v304
  %v320 = vunpack.c.l.b16 %v305
  %v321 = vpack.c.b16 %v318, %v317
  %v322 = vpack.c.b16 %v320, %v319
  %vm325 = vcmask 261120
  %v327 = vsel %vm325, %v294, 0
  %v330 = vsel %vm325, %v295, 0
  %v333 = vsel %vm325, %v296, 0
  %v336 = vsel %vm325, %v297, 0
  %v339 = vsel %vm325, %v298, 0
  %v342 = vsel %vm325, %v299, 0
  %v345 = vsel %vm325, %v300, 0
  %v348 = vsel %vm325, %v301, 0
  %350 = vmatprep.subr.bf16.mxu0 0
  %351 = vmatpush1.bf16.msra.mxu0 %v321
  %352 = vmatprep.subr.bf16.mxu0 0
  %353 = vmatpush1.bf16.msra.mxu0 %v322
  %354 = vmatprep.subr.bf16.mxu0 0
  %355 = vmatpush1.bf16.msra.mxu0 0
  %356 = vmatprep.subr.bf16.mxu0 0
  %357 = vmatpush1.bf16.msra.mxu0 0
  %358 = vmatprep.subr.bf16.mxu0 0
  %359 = vmatpush1.bf16.msra.mxu0 0
  %360 = vmatprep.subr.bf16.mxu0 0
  %361 = vmatpush1.bf16.msra.mxu0 0
  %362 = vmatprep.subr.bf16.mxu0 0
  %363 = vmatpush1.bf16.msra.mxu0 0
  %364 = vmatprep.subr.bf16.mxu0 0
  %365 = vmatpush1.bf16.msra.mxu0 0
  %366 = vmatprep.subr.bf16.mxu0 0
  %367 = vmatpush1.bf16.msra.mxu0 0
  %368 = vmatprep.subr.bf16.mxu0 0
  %369 = vmatpush1.bf16.msra.mxu0 0
  %370 = vmatprep.subr.bf16.mxu0 0
  %371 = vmatpush1.bf16.msra.mxu0 0
  %372 = vmatprep.subr.bf16.mxu0 0
  %373 = vmatpush1.bf16.msra.mxu0 0
  %374 = vmatprep.subr.bf16.mxu0 0
  %375 = vmatpush1.bf16.msra.mxu0 0
  %376 = vmatprep.subr.bf16.mxu0 0
  %377 = vmatpush1.bf16.msra.mxu0 0
  %378 = vmatprep.subr.bf16.mxu0 0
  %379 = vmatpush1.bf16.msra.mxu0 0
  %380 = vmatprep.subr.bf16.mxu0 0
  %381 = vmatpush1.bf16.msra.mxu0 0
  %382 = vmatprep.mubr.bf16.mxu0 0
  %383 = vmatmul.mubr.bf16.gmra.mrb[0].mxu0 %v327
  %v384 = vpop.f32.mrb[0].mxu0
  %v385 = vadd.f32 %v311, %v384
  %v386 = vpop.f32.mrb[0].mxu0
  %v387 = vpop.f32.mrb[0].mxu0
  %v388 = vadd.f32 %v311, %v387
  %v389 = vpop.f32.mrb[0].mxu0
  %390 = vmatprep.mubr.bf16.mxu0 0
  %391 = vmatmul.mubr.bf16.gmra.mrb[0].mxu0 %v330
  %v392 = vpop.f32.mrb[0].mxu0
  %v393 = vadd.f32 %v311, %v392
  %v394 = vpop.f32.mrb[0].mxu0
  %v395 = vpop.f32.mrb[0].mxu0
  %v396 = vadd.f32 %v311, %v395
  %v397 = vpop.f32.mrb[0].mxu0
  %398 = vmatprep.mubr.bf16.mxu0 0
  %399 = vmatmul.mubr.bf16.gmra.mrb[0].mxu0 %v333
  %v400 = vpop.f32.mrb[0].mxu0
  %v401 = vadd.f32 %v311, %v400
  %v402 = vpop.f32.mrb[0].mxu0
  %v403 = vpop.f32.mrb[0].mxu0
  %v404 = vadd.f32 %v311, %v403
  %v405 = vpop.f32.mrb[0].mxu0
  %406 = vmatprep.mubr.bf16.mxu0 0
  %407 = vmatmul.mubr.bf16.gmra.mrb[0].mxu0 %v336
  %v408 = vpop.f32.mrb[0].mxu0
  %v409 = vadd.f32 %v311, %v408
  %v410 = vpop.f32.mrb[0].mxu0
  %v411 = vpop.f32.mrb[0].mxu0
  %v412 = vadd.f32 %v311, %v411
  %v413 = vpop.f32.mrb[0].mxu0
  %414 = vmatprep.mubr.bf16.mxu0 0
  %415 = vmatmul.mubr.bf16.gmra.mrb[0].mxu0 %v339
  %v416 = vpop.f32.mrb[0].mxu0
  %v417 = vadd.f32 %v311, %v416
  %v418 = vpop.f32.mrb[0].mxu0
  %v419 = vpop.f32.mrb[0].mxu0
  %v420 = vadd.f32 %v311, %v419
  %v421 = vpop.f32.mrb[0].mxu0
  %422 = vmatprep.mubr.bf16.mxu0 0
  %423 = vmatmul.mubr.bf16.gmra.mrb[0].mxu0 %v342
  %v424 = vpop.f32.mrb[0].mxu0
  %v425 = vadd.f32 %v311, %v424
  %v426 = vpop.f32.mrb[0].mxu0
  %v427 = vpop.f32.mrb[0].mxu0
  %v428 = vadd.f32 %v311, %v427
  %v429 = vpop.f32.mrb[0].mxu0
  %430 = vmatprep.mubr.bf16.mxu0 0
  %431 = vmatmul.mubr.bf16.gmra.mrb[0].mxu0 %v345
  %v432 = vpop.f32.mrb[0].mxu0
  %v433 = vadd.f32 %v311, %v432
  %v434 = vpop.f32.mrb[0].mxu0
  %v435 = vpop.f32.mrb[0].mxu0
  %v436 = vadd.f32 %v311, %v435
  %v437 = vpop.f32.mrb[0].mxu0
  %438 = vmatprep.mubr.bf16.mxu0 0
  %439 = vmatmul.mubr.bf16.gmra.mrb[0].mxu0 %v348
  %v440 = vpop.f32.mrb[0].mxu0
  %v441 = vadd.f32 %v311, %v440
  %v442 = vpop.f32.mrb[0].mxu0
  %v443 = vpop.f32.mrb[0].mxu0
  %v444 = vadd.f32 %v311, %v443
  %v445 = vpop.f32.mrb[0].mxu0
  %446 = vdwg.mxu0
  %vm447 = vcmp.ge.f32.partialorder %v385, 0.0
  %vm448 = vcmp.ge.f32.partialorder %v388, 0.0
  %vm449 = vcmp.ge.f32.partialorder %v393, 0.0
  %vm450 = vcmp.ge.f32.partialorder %v396, 0.0
  %vm451 = vcmp.ge.f32.partialorder %v401, 0.0
  %vm452 = vcmp.ge.f32.partialorder %v404, 0.0
  %vm453 = vcmp.ge.f32.partialorder %v409, 0.0
  %vm454 = vcmp.ge.f32.partialorder %v412, 0.0
  %vm455 = vcmp.ge.f32.partialorder %v417, 0.0
  %vm456 = vcmp.ge.f32.partialorder %v420, 0.0
  %vm457 = vcmp.ge.f32.partialorder %v425, 0.0
  %vm458 = vcmp.ge.f32.partialorder %v428, 0.0
  %vm459 = vcmp.ge.f32.partialorder %v433, 0.0
  %vm460 = vcmp.ge.f32.partialorder %v436, 0.0
  %vm461 = vcmp.ge.f32.partialorder %v441, 0.0
  %vm462 = vcmp.ge.f32.partialorder %v444, 0.0
  %v463 = vmul.f32 %v385, 0.2
  %v464 = vmul.f32 %v388, 0.2
  %v465 = vmul.f32 %v393, 0.2
  %v466 = vmul.f32 %v396, 0.2
  %v467 = vmul.f32 %v401, 0.2
  %v468 = vmul.f32 %v404, 0.2
  %v469 = vmul.f32 %v409, 0.2
  %v470 = vmul.f32 %v412, 0.2
  %v471 = vmul.f32 %v417, 0.2
  %v472 = vmul.f32 %v420, 0.2
  %v473 = vmul.f32 %v425, 0.2
  %v474 = vmul.f32 %v428, 0.2
  %v475 = vmul.f32 %v433, 0.2
  %v476 = vmul.f32 %v436, 0.2
  %v477 = vmul.f32 %v441, 0.2
  %v478 = vmul.f32 %v444, 0.2
  %v479 = vsel %vm447, %v385, %v463
  %v480 = vsel %vm448, %v388, %v464
  %v481 = vsel %vm449, %v393, %v465
  %v482 = vsel %vm450, %v396, %v466
  %v483 = vsel %vm451, %v401, %v467
  %v484 = vsel %vm452, %v404, %v468
  %v485 = vsel %vm453, %v409, %v469
  %v486 = vsel %vm454, %v412, %v470
  %v487 = vsel %vm455, %v417, %v471
  %v488 = vsel %vm456, %v420, %v472
  %v489 = vsel %vm457, %v425, %v473
  %v490 = vsel %vm458, %v428, %v474
  %v491 = vsel %vm459, %v433, %v475
  %v492 = vsel %vm460, %v436, %v476
  %v493 = vsel %vm461, %v441, %v477
  %v494 = vsel %vm462, %v444, %v478
  %v495 = vpack.c.bf16 %v480, %v479
  %v496 = vpack.c.bf16 %v482, %v481
  %v497 = vpack.c.bf16 %v484, %v483
  %v498 = vpack.c.bf16 %v486, %v485
  %v499 = vpack.c.bf16 %v488, %v487
  %v500 = vpack.c.bf16 %v490, %v489
  %v501 = vpack.c.bf16 %v492, %v491
  %v502 = vpack.c.bf16 %v494, %v493
  %v511 = vunpack.c.l.b16 %v495
  %v512 = vunpack.c.h.b16 %v495
  %v513 = vunpack.c.l.b16 %v496
  %v514 = vunpack.c.h.b16 %v496
  %v515 = vunpack.c.l.b16 %v497
  %v516 = vunpack.c.h.b16 %v497
  %v517 = vunpack.c.l.b16 %v498
  %v518 = vunpack.c.h.b16 %v498
  %v519 = vunpack.c.l.b16 %v499
  %v520 = vunpack.c.h.b16 %v499
  %v521 = vunpack.c.l.b16 %v500
  %v522 = vunpack.c.h.b16 %v500
  %v523 = vunpack.c.l.b16 %v501
  %v524 = vunpack.c.h.b16 %v501
  %v525 = vunpack.c.l.b16 %v502
  %v526 = vunpack.c.h.b16 %v502
  %v527 = vpack.c.b16 %v511, %v511
  %v528 = vpack.c.b16 %v512, %v512
  %v529 = vpack.c.b16 %v513, %v513
  %v530 = vpack.c.b16 %v514, %v514
  %v531 = vpack.c.b16 %v515, %v515
  %v532 = vpack.c.b16 %v516, %v516
  %v533 = vpack.c.b16 %v517, %v517
  %v534 = vpack.c.b16 %v518, %v518
  %v535 = vpack.c.b16 %v519, %v519
  %v536 = vpack.c.b16 %v520, %v520
  %v537 = vpack.c.b16 %v521, %v521
  %v538 = vpack.c.b16 %v522, %v522
  %v539 = vpack.c.b16 %v523, %v523
  %v540 = vpack.c.b16 %v524, %v524
  %v541 = vpack.c.b16 %v525, %v525
  %v542 = vpack.c.b16 %v526, %v526
  %vm559 = vcmask 125952
  %560 = vst.msk [vmem:[%s5] sm:$0xf] %vm559, %v527
  %561 = vst.msk [vmem:[%s5 + $0x4] sm:$0xf] %vm559, %v528
  %562 = vst.msk [vmem:[%s5 + $0x8] sm:$0xf] %vm559, %v529
  %563 = vst.msk [vmem:[%s5 + $0xc] sm:$0xf] %vm559, %v530
  %564 = vst.msk [vmem:[%s5 + $0x10] sm:$0xf] %vm559, %v531
  %565 = vst.msk [vmem:[%s5 + $0x14] sm:$0xf] %vm559, %v532
  %566 = vst.msk [vmem:[%s5 + $0x18] sm:$0xf] %vm559, %v533
  %567 = vst.msk [vmem:[%s5 + $0x1c] sm:$0xf] %vm559, %v534
  %568 = vst.msk [vmem:[%s5 + $0x20] sm:$0xf] %vm559, %v535
  %569 = vst.msk [vmem:[%s5 + $0x24] sm:$0xf] %vm559, %v536
  %570 = vst.msk [vmem:[%s5 + $0x28] sm:$0xf] %vm559, %v537
  %571 = vst.msk [vmem:[%s5 + $0x2c] sm:$0xf] %vm559, %v538
  %572 = vst.msk [vmem:[%s5 + $0x30] sm:$0xf] %vm559, %v539
  %573 = vst.msk [vmem:[%s5 + $0x34] sm:$0xf] %vm559, %v540
  %574 = vst.msk [vmem:[%s5 + $0x38] sm:$0xf] %vm559, %v541
  %575 = vst.msk [vmem:[%s5 + $0x3c] sm:$0xf] %vm559, %v542
  // Predicated region
  $region22: #{discriminator_forward.5} parent=0 // pred_check
    _
  $region23: #{discriminator_forward.5} parent=0 // pred_check_branch
    %577 = sbr.rel (0) target = $region25
  $region24: #{discriminator_forward.5} parent=0 // pred_region
    _
  $region25: #{discriminator_forward.5} parent=0 // pred_fallthru
    _
  // Predicated region
  $region26: #{discriminator_forward.5} parent=0 // pred_check
    _
  $region27: #{discriminator_forward.5} parent=0 // pred_check_branch
    %579 = sbr.rel (0) target = $region29
  $region28: #{discriminator_forward.5} parent=0 // pred_region
    _
  $region29: #{discriminator_forward.5} parent=0 // pred_fallthru
    _

// kernel: discriminator_forward.6
$region0: #{discriminator_forward.6}
  #allocation0 [shape = 'u32[]', space=smem, size = 0x4, offset = 0x4, fixed_abs, tag = 'smem constant byte address 0x4 - core index']
  #allocation1 [shape = 'u32[144,128]{1,0:T(1,128)}', space=vmem, size = 0x12000, scoped, tag = 'internal scratch']
  %s0 = inlined_call_operand.vmem [shape: bf16[32,144], index: 0, kind: input, shape index: {}]
  %s1 = inlined_call_operand.vmem [shape: bf16[144,64], index: 1, kind: input, shape index: {}]
  %s2 = inlined_call_operand.vmem [shape: f32[1,64], index: 2, kind: input, shape index: {}]
  %s3 = inlined_call_operand.vmem [shape: bf16[64,32], index: 3, kind: input, shape index: {}]
  %s4 = inlined_call_operand.vmem [shape: f32[1,32], index: 4, kind: input, shape index: {}]
  %s5 = inlined_call_operand.vmem [shape: bf16[32,32], index: 5, kind: output, shape index: {}]
  %s6 = sld [smem:[#allocation0]]
  $region30: #{discriminator_forward.6} parent=0
    _
  %s8 = ssub.s32 1, %s6
  %s9 = scalar_select 0, %s8, %s6
  // Predicated region
  $region2: #{discriminator_forward.6} parent=0 // pred_check
    _
  $region3: #{discriminator_forward.6} parent=0 // pred_check_branch
    %11 = sbr.rel (0) target = $region5
  $region4: #{discriminator_forward.6} parent=0 // pred_region
    _
  $region5: #{discriminator_forward.6} parent=0 // pred_fallthru
    _
  // Predicated region
  $region6: #{discriminator_forward.6} parent=0 // pred_check
    _
  $region7: #{discriminator_forward.6} parent=0 // pred_check_branch
    %13 = sbr.rel (0) target = $region9
  $region8: #{discriminator_forward.6} parent=0 // pred_region
    _
  $region9: #{discriminator_forward.6} parent=0 // pred_fallthru
    _
  // Predicated region
  $region10: #{discriminator_forward.6} parent=0 // pred_check
    _
  $region11: #{discriminator_forward.6} parent=0 // pred_check_branch
    %15 = sbr.rel (0) target = $region13
  $region12: #{discriminator_forward.6} parent=0 // pred_region
    _
  $region13: #{discriminator_forward.6} parent=0 // pred_fallthru
    _
  // Predicated region
  $region14: #{discriminator_forward.6} parent=0 // pred_check
    _
  $region15: #{discriminator_forward.6} parent=0 // pred_check_branch
    %17 = sbr.rel (0) target = $region17
  $region16: #{discriminator_forward.6} parent=0 // pred_region
    _
  $region17: #{discriminator_forward.6} parent=0 // pred_fallthru
    _
  // Predicated region
  $region18: #{discriminator_forward.6} parent=0 // pred_check
    _
  $region19: #{discriminator_forward.6} parent=0 // pred_check_branch
    %19 = sbr.rel (0) target = $region21
  $region20: #{discriminator_forward.6} parent=0 // pred_region
    _
  $region21: #{discriminator_forward.6} parent=0 // pred_fallthru
    _
  %v21 = vld [vmem:[%s0] sm:$0xff]
  %v22 = vld [vmem:[%s0 + $0x8] sm:$0xff]
  %v23 = vld [vmem:[%s0 + $0x10] sm:$0xff]
  %v24 = vld [vmem:[%s0 + $0x18] sm:$0xff]
  %v25 = vld [vmem:[%s1] sm:$0xf]
  %v26 = vld [vmem:[%s1 + $0x4] sm:$0xf]
  %v27 = vld [vmem:[%s1 + $0x8] sm:$0xf]
  %v28 = vld [vmem:[%s1 + $0xc] sm:$0xf]
  %v29 = vld [vmem:[%s1 + $0x10] sm:$0xf]
  %v30 = vld [vmem:[%s1 + $0x14] sm:$0xf]
  %v31 = vld [vmem:[%s1 + $0x18] sm:$0xf]
  %v32 = vld [vmem:[%s1 + $0x1c] sm:$0xf]
  %v33 = vld [vmem:[%s1 + $0x20] sm:$0xf]
  %v34 = vld [vmem:[%s1 + $0x24] sm:$0xf]
  %v35 = vld [vmem:[%s1 + $0x28] sm:$0xf]
  %v36 = vld [vmem:[%s1 + $0x2c] sm:$0xf]
  %v37 = vld [vmem:[%s1 + $0x30] sm:$0xf]
  %v38 = vld [vmem:[%s1 + $0x34] sm:$0xf]
  %v39 = vld [vmem:[%s1 + $0x38] sm:$0xf]
  %v40 = vld [vmem:[%s1 + $0x3c] sm:$0xf]
  %v41 = vld [vmem:[%s1 + $0x40] sm:$0xf]
  %v42 = vld [vmem:[%s1 + $0x44] sm:$0xf]
  %v43 = vld [vmem:[%s2] sm:$0x1]
  %v45 = vlaneseq
  %v46 = vshrl.u32 %v45, 7
  %v47 = vsub.s32 0, %v46
  %v48 = vrot.slane %v43, %v47
  %v54 = vunpack.c.l.b16 %v21
  %v55 = vunpack.c.h.b16 %v21
  %v56 = vunpack.c.l.b16 %v22
  %v57 = vunpack.c.h.b16 %v22
  %v58 = vunpack.c.l.b16 %v23
  %v59 = vunpack.c.h.b16 %v23
  %v60 = vunpack.c.l.b16 %v24
  %v61 = vunpack.c.h.b16 %v24
  %v62 = vpack.c.b16 %v56, %v54
  %v63 = vpack.c.b16 %v57, %v55
  %v64 = vpack.c.b16 %v60, %v58
  %v65 = vpack.c.b16 %v61, %v59
  %v86 = vunpack.c.l.b16 %v25
  %v87 = vunpack.c.l.b16 %v26
  %v88 = vunpack.c.l.b16 %v27
  %v89 = vunpack.c.l.b16 %v28
  %v90 = vunpack.c.l.b16 %v29
  %v91 = vunpack.c.l.b16 %v30
  %v92 = vunpack.c.l.b16 %v31
  %v93 = vunpack.c.l.b16 %v32
  %v94 = vunpack.c.l.b16 %v33
  %v95 = vunpack.c.l.b16 %v34
  %v96 = vunpack.c.l.b16 %v35
  %v97 = vunpack.c.l.b16 %v36
  %v98 = vunpack.c.l.b16 %v37
  %v99 = vunpack.c.l.b16 %v38
  %v100 = vunpack.c.l.b16 %v39
  %v101 = vunpack.c.l.b16 %v40
  %v102 = vunpack.c.l.b16 %v41
  %v103 = vunpack.c.l.b16 %v42
  %v104 = vpack.c.b16 %v87, %v86
  %v105 = vpack.c.b16 %v89, %v88
  %v106 = vpack.c.b16 %v91, %v90
  %v107 = vpack.c.b16 %v93, %v92
  %v108 = vpack.c.b16 %v95, %v94
  %v109 = vpack.c.b16 %v97, %v96
  %v110 = vpack.c.b16 %v99, %v98
  %v111 = vpack.c.b16 %v101, %v100
  %v112 = vpack.c.b16 %v103, %v102
  %vm122 = vcmask 130048
  %v124 = vsel %vm122, %v63, 0
  %v127 = vsel %vm122, %v65, 0
  %129 = vmatprep.subr.bf16.mxu0 0
  %130 = vmatpush1.bf16.msra.mxu0 %v104
  %131 = vmatprep.subr.bf16.mxu0 0
  %132 = vmatpush1.bf16.msra.mxu0 %v105
  %133 = vmatprep.subr.bf16.mxu0 0
  %134 = vmatpush1.bf16.msra.mxu0 %v106
  %135 = vmatprep.subr.bf16.mxu0 0
  %136 = vmatpush1.bf16.msra.mxu0 %v107
  %137 = vmatprep.subr.bf16.mxu0 0
  %138 = vmatpush1.bf16.msra.mxu0 %v108
  %139 = vmatprep.subr.bf16.mxu0 0
  %140 = vmatpush1.bf16.msra.mxu0 %v109
  %141 = vmatprep.subr.bf16.mxu0 0
  %142 = vmatpush1.bf16.msra.mxu0 %v110
  %143 = vmatprep.subr.bf16.mxu0 0
  %144 = vmatpush1.bf16.msra.mxu0 %v111
  %145 = vmatprep.subr.bf16.mxu0 0
  %146 = vmatpush1.bf16.msra.mxu0 %v112
  %147 = vmatprep.subr.bf16.mxu0 0
  %148 = vmatpush1.bf16.msra.mxu0 0
  %149 = vmatprep.subr.bf16.mxu0 0
  %150 = vmatpush1.bf16.msra.mxu0 0
  %151 = vmatprep.subr.bf16.mxu0 0
  %152 = vmatpush1.bf16.msra.mxu0 0
  %153 = vmatprep.subr.bf16.mxu0 0
  %154 = vmatpush1.bf16.msra.mxu0 0
  %155 = vmatprep.subr.bf16.mxu0 0
  %156 = vmatpush1.bf16.msra.mxu0 0
  %157 = vmatprep.subr.bf16.mxu0 0
  %158 = vmatpush1.bf16.msra.mxu0 0
  %159 = vmatprep.subr.bf16.mxu0 0
  %160 = vmatpush1.bf16.msra.mxu0 0
  %161 = vmatprep.mubr.bf16.mxu0 %v124
  %162 = vmatmul.mubr.bf16.gmra.mrb[0].mxu0 %v62
  %v163 = vpop.f32.mrb[0].mxu0
  %v164 = vadd.f32 %v48, %v163
  %v165 = vpop.f32.mrb[0].mxu0
  %v166 = vpop.f32.mrb[0].mxu0
  %v167 = vadd.f32 %v48, %v166
  %v168 = vpop.f32.mrb[0].mxu0
  %169 = vmatprep.mubr.bf16.mxu0 %v127
  %170 = vmatmul.mubr.bf16.gmra.mrb[0].mxu0 %v64
  %v171 = vpop.f32.mrb[0].mxu0
  %v172 = vadd.f32 %v48, %v171
  %v173 = vpop.f32.mrb[0].mxu0
  %v174 = vpop.f32.mrb[0].mxu0
  %v175 = vadd.f32 %v48, %v174
  %v176 = vpop.f32.mrb[0].mxu0
  %177 = vdwg.mxu0
  %vm178 = vcmp.ge.f32.partialorder %v164, 0.0
  %vm179 = vcmp.ge.f32.partialorder %v167, 0.0
  %vm180 = vcmp.ge.f32.partialorder %v172, 0.0
  %vm181 = vcmp.ge.f32.partialorder %v175, 0.0
  %v182 = vmul.f32 %v164, 0.2
  %v183 = vmul.f32 %v167, 0.2
  %v184 = vmul.f32 %v172, 0.2
  %v185 = vmul.f32 %v175, 0.2
  %v186 = vsel %vm178, %v164, %v182
  %v187 = vsel %vm179, %v167, %v183
  %v188 = vsel %vm180, %v172, %v184
  %v189 = vsel %vm181, %v175, %v185
  %v190 = vpack.c.bf16 %v187, %v186
  %v191 = vpack.c.bf16 %v189, %v188
  %v192 = vld [vmem:[%s3] sm:$0xf]
  %v193 = vld [vmem:[%s3 + $0x4] sm:$0xf]
  %v194 = vld [vmem:[%s3 + $0x8] sm:$0xf]
  %v195 = vld [vmem:[%s3 + $0xc] sm:$0xf]
  %v196 = vld [vmem:[%s3 + $0x10] sm:$0xf]
  %v197 = vld [vmem:[%s3 + $0x14] sm:$0xf]
  %v198 = vld [vmem:[%s3 + $0x18] sm:$0xf]
  %v199 = vld [vmem:[%s3 + $0x1c] sm:$0xf]
  %v200 = vld [vmem:[%s4] sm:$0x1]
  %v202 = vlaneseq
  %v203 = vshrl.u32 %v202, 7
  %v204 = vsub.s32 0, %v203
  %v205 = vrot.slane %v200, %v204
  %v215 = vunpack.c.l.b16 %v192
  %v216 = vunpack.c.l.b16 %v193
  %v217 = vunpack.c.l.b16 %v194
  %v218 = vunpack.c.l.b16 %v195
  %v219 = vunpack.c.l.b16 %v196
  %v220 = vunpack.c.l.b16 %v197
  %v221 = vunpack.c.l.b16 %v198
  %v222 = vunpack.c.l.b16 %v199
  %v223 = vpack.c.b16 %v216, %v215
  %v224 = vpack.c.b16 %v218, %v217
  %v225 = vpack.c.b16 %v220, %v219
  %v226 = vpack.c.b16 %v222, %v221
  %vm231 = vcmask 523264
  %v233 = vsel %vm231, %v190, 0
  %v236 = vsel %vm231, %v191, 0
  %238 = vmatprep.subr.bf16.mxu0 0
  %239 = vmatpush1.bf16.msra.mxu0 %v223
  %240 = vmatprep.subr.bf16.mxu0 0
  %241 = vmatpush1.bf16.msra.mxu0 %v224
  %242 = vmatprep.subr.bf16.mxu0 0
  %243 = vmatpush1.bf16.msra.mxu0 %v225
  %244 = vmatprep.subr.bf16.mxu0 0
  %245 = vmatpush1.bf16.msra.mxu0 %v226
  %246 = vmatprep.subr.bf16.mxu0 0
  %247 = vmatpush1.bf16.msra.mxu0 0
  %248 = vmatprep.subr.bf16.mxu0 0
  %249 = vmatpush1.bf16.msra.mxu0 0
  %250 = vmatprep.subr.bf16.mxu0 0
  %251 = vmatpush1.bf16.msra.mxu0 0
  %252 = vmatprep.subr.bf16.mxu0 0
  %253 = vmatpush1.bf16.msra.mxu0 0
  %254 = vmatprep.subr.bf16.mxu0 0
  %255 = vmatpush1.bf16.msra.mxu0 0
  %256 = vmatprep.subr.bf16.mxu0 0
  %257 = vmatpush1.bf16.msra.mxu0 0
  %258 = vmatprep.subr.bf16.mxu0 0
  %259 = vmatpush1.bf16.msra.mxu0 0
  %260 = vmatprep.subr.bf16.mxu0 0
  %261 = vmatpush1.bf16.msra.mxu0 0
  %262 = vmatprep.subr.bf16.mxu0 0
  %263 = vmatpush1.bf16.msra.mxu0 0
  %264 = vmatprep.subr.bf16.mxu0 0
  %265 = vmatpush1.bf16.msra.mxu0 0
  %266 = vmatprep.subr.bf16.mxu0 0
  %267 = vmatpush1.bf16.msra.mxu0 0
  %268 = vmatprep.subr.bf16.mxu0 0
  %269 = vmatpush1.bf16.msra.mxu0 0
  %270 = vmatprep.mubr.bf16.mxu0 0
  %271 = vmatmul.mubr.bf16.gmra.mrb[0].mxu0 %v233
  %v272 = vpop.f32.mrb[0].mxu0
  %v273 = vadd.f32 %v205, %v272
  %v274 = vpop.f32.mrb[0].mxu0
  %v275 = vpop.f32.mrb[0].mxu0
  %v276 = vadd.f32 %v205, %v275
  %v277 = vpop.f32.mrb[0].mxu0
  %278 = vmatprep.mubr.bf16.mxu0 0
  %279 = vmatmul.mubr.bf16.gmra.mrb[0].mxu0 %v236
  %v280 = vpop.f32.mrb[0].mxu0
  %v281 = vadd.f32 %v205, %v280
  %v282 = vpop.f32.mrb[0].mxu0
  %v283 = vpop.f32.mrb[0].mxu0
  %v284 = vadd.f32 %v205, %v283
  %v285 = vpop.f32.mrb[0].mxu0
  %286 = vdwg.mxu0
  %vm287 = vcmp.ge.f32.partialorder %v273, 0.0
  %vm288 = vcmp.ge.f32.partialorder %v276, 0.0
  %vm289 = vcmp.ge.f32.partialorder %v281, 0.0
  %vm290 = vcmp.ge.f32.partialorder %v284, 0.0
  %v291 = vmul.f32 %v273, 0.2
  %v292 = vmul.f32 %v276, 0.2
  %v293 = vmul.f32 %v281, 0.2
  %v294 = vmul.f32 %v284, 0.2
  %v295 = vsel %vm287, %v273, %v291
  %v296 = vsel %vm288, %v276, %v292
  %v297 = vsel %vm289, %v281, %v293
  %v298 = vsel %vm290, %v284, %v294
  %v299 = vpack.c.bf16 %v296, %v295
  %v300 = vpack.c.bf16 %v298, %v297
  %v303 = vunpack.c.l.b16 %v299
  %v304 = vunpack.c.h.b16 %v299
  %v305 = vunpack.c.l.b16 %v300
  %v306 = vunpack.c.h.b16 %v300
  %v307 = vpack.c.b16 %v303, %v303
  %v308 = vpack.c.b16 %v304, %v304
  %v309 = vpack.c.b16 %v305, %v305
  %v310 = vpack.c.b16 %v306, %v306
  %vm315 = vcmask 257024
  %316 = vst.msk [vmem:[%s5] sm:$0xf] %vm315, %v307
  %317 = vst.msk [vmem:[%s5 + $0x4] sm:$0xf] %vm315, %v308
  %318 = vst.msk [vmem:[%s5 + $0x8] sm:$0xf] %vm315, %v309
  %319 = vst.msk [vmem:[%s5 + $0xc] sm:$0xf] %vm315, %v310
  // Predicated region
  $region22: #{discriminator_forward.6} parent=0 // pred_check
    _
  $region23: #{discriminator_forward.6} parent=0 // pred_check_branch
    %321 = sbr.rel (0) target = $region25
  $region24: #{discriminator_forward.6} parent=0 // pred_region
    _
  $region25: #{discriminator_forward.6} parent=0 // pred_fallthru
    _
  // Predicated region
  $region26: #{discriminator_forward.6} parent=0 // pred_check
    _
  $region27: #{discriminator_forward.6} parent=0 // pred_check_branch
    %323 = sbr.rel (0) target = $region29
  $region28: #{discriminator_forward.6} parent=0 // pred_region
    _
  $region29: #{discriminator_forward.6} parent=0 // pred_fallthru
    _

// kernel: discriminator_forward.7
$region0: #{discriminator_forward.7}
  #allocation0 [shape = 'u32[]', space=smem, size = 0x4, offset = 0x4, fixed_abs, tag = 'smem constant byte address 0x4 - core index']
  #allocation1 [shape = 'u32[144,128]{1,0:T(1,128)}', space=vmem, size = 0x12000, scoped, tag = 'internal scratch']
  %s0 = inlined_call_operand.vmem [shape: bf16[18,128], index: 0, kind: input, shape index: {}]
  %s1 = inlined_call_operand.vmem [shape: bf16[128,128], index: 1, kind: input, shape index: {}]
  %s2 = inlined_call_operand.vmem [shape: f32[1,128], index: 2, kind: input, shape index: {}]
  %s3 = inlined_call_operand.vmem [shape: f32[1,512], index: 3, kind: input, shape index: {}]
  %s4 = inlined_call_operand.vmem [shape: f32[8,1], index: 4, kind: output, shape index: {}]
  %s5 = sld [smem:[#allocation0]]
  $region26: #{discriminator_forward.7} parent=0
    _
  %s7 = ssub.s32 1, %s5
  %s8 = scalar_select 0, %s7, %s5
  // Predicated region
  $region2: #{discriminator_forward.7} parent=0 // pred_check
    _
  $region3: #{discriminator_forward.7} parent=0 // pred_check_branch
    %10 = sbr.rel (0) target = $region5
  $region4: #{discriminator_forward.7} parent=0 // pred_region
    _
  $region5: #{discriminator_forward.7} parent=0 // pred_fallthru
    _
  // Predicated region
  $region6: #{discriminator_forward.7} parent=0 // pred_check
    _
  $region7: #{discriminator_forward.7} parent=0 // pred_check_branch
    %12 = sbr.rel (0) target = $region9
  $region8: #{discriminator_forward.7} parent=0 // pred_region
    _
  $region9: #{discriminator_forward.7} parent=0 // pred_fallthru
    _
  // Predicated region
  $region10: #{discriminator_forward.7} parent=0 // pred_check
    _
  $region11: #{discriminator_forward.7} parent=0 // pred_check_branch
    %14 = sbr.rel (0) target = $region13
  $region12: #{discriminator_forward.7} parent=0 // pred_region
    _
  $region13: #{discriminator_forward.7} parent=0 // pred_fallthru
    _
  // Predicated region
  $region14: #{discriminator_forward.7} parent=0 // pred_check
    _
  $region15: #{discriminator_forward.7} parent=0 // pred_check_branch
    %16 = sbr.rel (0) target = $region17
  $region16: #{discriminator_forward.7} parent=0 // pred_region
    _
  $region17: #{discriminator_forward.7} parent=0 // pred_fallthru
    _
  %v18 = vld [vmem:[%s0] sm:$0xf]
  %v19 = vld [vmem:[%s0 + $0x4] sm:$0xf]
  %v20 = vld [vmem:[%s0 + $0x8] sm:$0x1]
  %v21 = vld [vmem:[%s1] sm:$0xf]
  %v22 = vld [vmem:[%s1 + $0x4] sm:$0xf]
  %v23 = vld [vmem:[%s1 + $0x8] sm:$0xf]
  %v24 = vld [vmem:[%s1 + $0xc] sm:$0xf]
  %v25 = vld [vmem:[%s1 + $0x10] sm:$0xf]
  %v26 = vld [vmem:[%s1 + $0x14] sm:$0xf]
  %v27 = vld [vmem:[%s1 + $0x18] sm:$0xf]
  %v28 = vld [vmem:[%s1 + $0x1c] sm:$0xf]
  %v29 = vld [vmem:[%s1 + $0x20] sm:$0xf]
  %v30 = vld [vmem:[%s1 + $0x24] sm:$0xf]
  %v31 = vld [vmem:[%s1 + $0x28] sm:$0xf]
  %v32 = vld [vmem:[%s1 + $0x2c] sm:$0xf]
  %v33 = vld [vmem:[%s1 + $0x30] sm:$0xf]
  %v34 = vld [vmem:[%s1 + $0x34] sm:$0xf]
  %v35 = vld [vmem:[%s1 + $0x38] sm:$0xf]
  %v36 = vld [vmem:[%s1 + $0x3c] sm:$0xf]
  %v37 = vld [vmem:[%s2] sm:$0x1]
  %v39 = vlaneseq
  %v40 = vshrl.u32 %v39, 7
  %v41 = vsub.s32 0, %v40
  %v42 = vrot.slane %v37, %v41
  %v47 = vunpack.c.l.b16 %v18
  %v48 = vunpack.c.l.b16 %v19
  %v49 = vunpack.c.l.b16 %v20
  %v50 = vpack.c.b16 %v48, %v47
  %v51 = vpack.c.b16 %v49, %v49
  %v70 = vunpack.c.l.b16 %v21
  %v71 = vunpack.c.l.b16 %v22
  %v72 = vunpack.c.l.b16 %v23
  %v73 = vunpack.c.l.b16 %v24
  %v74 = vunpack.c.l.b16 %v25
  %v75 = vunpack.c.l.b16 %v26
  %v76 = vunpack.c.l.b16 %v27
  %v77 = vunpack.c.l.b16 %v28
  %v78 = vunpack.c.l.b16 %v29
  %v79 = vunpack.c.l.b16 %v30
  %v80 = vunpack.c.l.b16 %v31
  %v81 = vunpack.c.l.b16 %v32
  %v82 = vunpack.c.l.b16 %v33
  %v83 = vunpack.c.l.b16 %v34
  %v84 = vunpack.c.l.b16 %v35
  %v85 = vunpack.c.l.b16 %v36
  %v86 = vpack.c.b16 %v71, %v70
  %v87 = vpack.c.b16 %v73, %v72
  %v88 = vpack.c.b16 %v75, %v74
  %v89 = vpack.c.b16 %v77, %v76
  %v90 = vpack.c.b16 %v79, %v78
  %v91 = vpack.c.b16 %v81, %v80
  %v92 = vpack.c.b16 %v83, %v82
  %v93 = vpack.c.b16 %v85, %v84
  %102 = vmatprep.subr.bf16.mxu0 0
  %103 = vmatpush1.bf16.msra.mxu0 %v86
  %104 = vmatprep.subr.bf16.mxu0 0
  %105 = vmatpush1.bf16.msra.mxu0 %v87
  %106 = vmatprep.subr.bf16.mxu0 0
  %107 = vmatpush1.bf16.msra.mxu0 %v88
  %108 = vmatprep.subr.bf16.mxu0 0
  %109 = vmatpush1.bf16.msra.mxu0 %v89
  %110 = vmatprep.subr.bf16.mxu0 0
  %111 = vmatpush1.bf16.msra.mxu0 %v90
  %112 = vmatprep.subr.bf16.mxu0 0
  %113 = vmatpush1.bf16.msra.mxu0 %v91
  %114 = vmatprep.subr.bf16.mxu0 0
  %115 = vmatpush1.bf16.msra.mxu0 %v92
  %116 = vmatprep.subr.bf16.mxu0 0
  %117 = vmatpush1.bf16.msra.mxu0 %v93
  %118 = vmatprep.subr.bf16.mxu0 0
  %119 = vmatpush1.bf16.msra.mxu0 0
  %120 = vmatprep.subr.bf16.mxu0 0
  %121 = vmatpush1.bf16.msra.mxu0 0
  %122 = vmatprep.subr.bf16.mxu0 0
  %123 = vmatpush1.bf16.msra.mxu0 0
  %124 = vmatprep.subr.bf16.mxu0 0
  %125 = vmatpush1.bf16.msra.mxu0 0
  %126 = vmatprep.subr.bf16.mxu0 0
  %127 = vmatpush1.bf16.msra.mxu0 0
  %128 = vmatprep.subr.bf16.mxu0 0
  %129 = vmatpush1.bf16.msra.mxu0 0
  %130 = vmatprep.subr.bf16.mxu0 0
  %131 = vmatpush1.bf16.msra.mxu0 0
  %132 = vmatprep.subr.bf16.mxu0 0
  %133 = vmatpush1.bf16.msra.mxu0 0
  %134 = vmatprep.mubr.bf16.mxu0 0
  %135 = vmatmul.mubr.bf16.gmra.mrb[0].mxu0 %v50
  %v136 = vpop.f32.mrb[0].mxu0
  %v137 = vadd.f32 %v42, %v136
  %v138 = vpop.f32.mrb[0].mxu0
  %v139 = vpop.f32.mrb[0].mxu0
  %v140 = vadd.f32 %v42, %v139
  %v141 = vpop.f32.mrb[0].mxu0
  %142 = vmatprep.mubr.bf16.mxu0 0
  %143 = vmatmul.mubr.bf16.gmra.mrb[0].mxu0 %v51
  %v144 = vpop.f32.mrb[0].mxu0
  %v145 = vadd.f32 %v42, %v144
  %v146 = vpop.f32.mrb[0].mxu0
  %v147 = vpop.f32.mrb[0].mxu0
  %v148 = vpop.f32.mrb[0].mxu0
  %149 = vdwg.mxu0
  %vm150 = vcmp.ge.f32.partialorder %v137, 0.0
  %vm151 = vcmp.ge.f32.partialorder %v140, 0.0
  %vm152 = vcmp.ge.f32.partialorder %v145, 0.0
  %v153 = vmul.f32 %v137, 0.2
  %v154 = vmul.f32 %v140, 0.2
  %v155 = vmul.f32 %v145, 0.2
  %v156 = vsel %vm150, %v137, %v153
  %v157 = vsel %vm151, %v140, %v154
  %v158 = vsel %vm152, %v145, %v155
  %v160 = vrot.slane %v156, 1
  %v162 = vrot.slane %v156, 3
  %v164 = vrot.slane %v156, 4
  %v167 = vrot.slane %v157, 4
  %v168 = vrot.slane %v157, 1
  %v169 = vrot.slane %v157, 3
  %v171 = vrot.slane %v158, 4
  %v172 = vrot.slane %v158, 3
  %v173 = vrot.slane %v160, 1
  %v174 = vrot.slane %v162, 1
  %v175 = vrot.slane %v164, 1
  %v179 = vrot.slane %v167, 1
  %v181 = vrot.slane %v157, 5
  %v182 = vrot.slane %v168, 5
  %v183 = vrot.slane %v169, 5
  %v184 = vrot.slane %v167, 5
  %v189 = vrot.slane %v157, 6
  %v190 = vrot.slane %v168, 6
  %v191 = vrot.slane %v169, 6
  %v192 = vrot.slane %v171, 6
  %v197 = vrot.slane %v172, 6
  %vm199 = vcmask 1041408
  %v200 = vsel %vm199, %v156, %v160
  %v201 = vsel %vm199, %v160, %v173
  %v202 = vsel %vm199, %v162, %v174
  %v203 = vsel %vm199, %v164, %v175
  %vm204 = vcmask 1042432
  %v205 = vsel %vm204, %v200, %v160
  %v206 = vsel %vm204, %v201, %v173
  %v207 = vsel %vm204, %v202, %v174
  %v208 = vsel %vm204, %v203, %v179
  %vm209 = vcmask 1043456
  %v210 = vsel %vm209, %v205, %v181
  %v211 = vsel %vm209, %v206, %v182
  %v212 = vsel %vm209, %v207, %v183
  %v213 = vsel %vm209, %v208, %v184
  %vm214 = vcmask 1044480
  %v215 = vsel %vm214, %v210, %v181
  %v216 = vsel %vm214, %v211, %v182
  %v217 = vsel %vm214, %v212, %v183
  %v218 = vsel %vm214, %v213, %v184
  %vm219 = vcmask 1045504
  %v220 = vsel %vm219, %v215, %v189
  %v221 = vsel %vm219, %v216, %v190
  %v222 = vsel %vm219, %v217, %v191
  %v223 = vsel %vm219, %v218, %v192
  %vm224 = vcmask 1046528
  %v225 = vsel %vm224, %v220, %v189
  %v226 = vsel %vm224, %v221, %v190
  %v227 = vsel %vm224, %v222, %v197
  %v228 = vsel %vm224, %v223, %v192
  %v229 = vld [vmem:[%s3] sm:$0xf]
  %v231 = vlaneseq
  %v232 = vshrl.u32 %v231, 7
  %v233 = vsub.s32 0, %v232
  %v234 = vrot.slane %v229, %v233
  %v235 = vlaneseq
  %v236 = vshrl.u32 %v235, 7
  %v237 = vsub.s32 1, %v236
  %v238 = vrot.slane %v229, %v237
  %v239 = vlaneseq
  %v240 = vshrl.u32 %v239, 7
  %v241 = vsub.s32 2, %v240
  %v242 = vrot.slane %v229, %v241
  %v243 = vlaneseq
  %v244 = vshrl.u32 %v243, 7
  %v245 = vsub.s32 3, %v244
  %v246 = vrot.slane %v229, %v245
  %v251 = vmul.f32 %v225, %v234
  %v252 = vmul.f32 %v226, %v238
  %v253 = vmul.f32 %v227, %v242
  %v254 = vmul.f32 %v228, %v246
  %v255 = vadd.f32 %v251, %v252
  %v256 = vadd.f32 %v255, %v253
  %v257 = vadd.f32 %v256, %v254
  %258 = vadd.xlane.f32.xlu0 %v257
  %v259 = vpop.xlane.xlu0 %258
  %v260 = vmul.f32 %v259, 0.5
  %v261 = vtanh.pop %v260
  %v262 = vadd.f32 %v261, 1.0
  %v263 = vmul.f32 %v262, 0.5
  %vm264 = vcmask 7168
  %265 = vst.msk [vmem:[%s4] sm:$0xff] %vm264, %v263
  // Predicated region
  $region18: #{discriminator_forward.7} parent=0 // pred_check
    _
  $region19: #{discriminator_forward.7} parent=0 // pred_check_branch
    %267 = sbr.rel (0) target = $region21
  $region20: #{discriminator_forward.7} parent=0 // pred_region
    _
  $region21: #{discriminator_forward.7} parent=0 // pred_fallthru
    _
  // Predicated region
  $region22: #{discriminator_forward.7} parent=0 // pred_check
    _
  $region23: #{discriminator_forward.7} parent=0 // pred_check_branch
    %269 = sbr.rel (0) target = $region25
  $region24: #{discriminator_forward.7} parent=0 // pred_region
    _
  $region25: #{discriminator_forward.7} parent=0 // pred_fallthru
    _

</llo_original>
